<compile_context>
chip_gen: v6e
topology: v6e:2x2x1
jax: 0.10.0
libtpu: 0.0.40
codegen_flags: <defaults>
</compile_context>

<pallas_src>
import math
import functools

import jax
import jax.numpy as jnp
from jax import lax
from jax.experimental import pallas as pl
from jax.experimental.pallas import tpu as pltpu


# ---------------------------------------------------------------------------
# Tiled linear:  y = act(x @ w + b)
#   x: [M, K]   w: [K, N]   b: [1, N]
# 3-axis grid (M/tm, N/tn, K/tk) with an f32 VMEM accumulator, zeroed at k==0
# and finalized (bias add + optional activation + cast) at k==last.  M/N axes
# are "parallel" (megacore sharding on v7x), K is "arbitrary" (reduction).
# Bias is indexed only by j, so it is not re-DMAed per K step.
# ---------------------------------------------------------------------------
def _matmul_bias_kernel(x_ref, w_ref, b_ref, o_ref, acc_ref, *, activation):
    @pl.when(pl.program_id(2) == 0)
    def _():
        acc_ref[...] = jnp.zeros_like(acc_ref)

    acc_ref[...] += jnp.dot(x_ref[...], w_ref[...],
                            preferred_element_type=jnp.float32)

    @pl.when(pl.program_id(2) == pl.num_programs(2) - 1)
    def _():
        y = acc_ref[...] + b_ref[...].astype(jnp.float32)
        if activation == "relu":
            y = jnp.maximum(y, 0.0)
        elif activation == "gelu":
            # tanh-approx GELU (PyTorch F.gelu is erf-exact; difference is tiny).
            c = math.sqrt(2.0 / math.pi)
            y = 0.5 * y * (1.0 + jnp.tanh(c * (y + 0.044715 * y * y * y)))
        o_ref[...] = y.astype(o_ref.dtype)


def _pick_tile(dim, prefs):
    # Prefer MXU/lane-aligned tiles; fall back to the full dimension when it
    # is small or does not divide evenly (keeps (8,128) BlockSpec rules valid).
    for p in prefs:
        if dim >= p and dim % p == 0:
            return p
    return dim


def linear(x, w, b, activation=None):
    M, K = x.shape
    _, N = w.shape
    tm = _pick_tile(M, (256, 128))
    tn = _pick_tile(N, (256, 128))          # lane-dense output tiles when possible
    tk = _pick_tile(K, (512, 256, 128))
    grid = (M // tm, N // tn, K // tk)
    return pl.pallas_call(
        functools.partial(_matmul_bias_kernel, activation=activation),
        out_shape=jax.ShapeDtypeStruct((M, N), x.dtype),
        grid_spec=pltpu.PrefetchScalarGridSpec(
            num_scalar_prefetch=0,
            grid=grid,
            in_specs=[
                pl.BlockSpec((tm, tk), lambda i, j, k: (i, k)),
                pl.BlockSpec((tk, tn), lambda i, j, k: (k, j)),
                pl.BlockSpec((1, tn), lambda i, j, k: (0, j)),
            ],
            out_specs=pl.BlockSpec((tm, tn), lambda i, j, k: (i, j)),
            scratch_shapes=[pltpu.VMEM((tm, tn), jnp.float32)],
        ),
        compiler_params=pltpu.CompilerParams(
            dimension_semantics=("parallel", "parallel", "arbitrary")),
    )(x, w, b)


# ---------------------------------------------------------------------------
# Fused self-attention, one (batch, head) tile per grid step.
# Sequence length of this module (cfg.max_len) is small, so the full [T, T]
# score tile fits in VMEM; softmax is done in f32 inside the kernel.
# ---------------------------------------------------------------------------
def _attention_kernel(q_ref, k_ref, v_ref, o_ref, *, scale):
    q = q_ref[...].astype(jnp.float32)          # [T, hd]
    k = k_ref[...].astype(jnp.float32)
    v = v_ref[...].astype(jnp.float32)
    s = jnp.dot(q, k.T, preferred_element_type=jnp.float32) * scale
    s = s - jnp.max(s, axis=-1, keepdims=True)
    p = jnp.exp(s)
    l = jnp.sum(p, axis=-1, keepdims=True)
    o = jnp.dot(p, v, preferred_element_type=jnp.float32) / l
    o_ref[...] = o.astype(o_ref.dtype)


def attention(q, k, v):
    # q, k, v: [B, H, T, hd]
    B, H, T, hd = q.shape
    scale = 1.0 / math.sqrt(hd)
    spec = pl.BlockSpec((None, None, T, hd), lambda b, h: (b, h, 0, 0))
    return pl.pallas_call(
        functools.partial(_attention_kernel, scale=scale),
        out_shape=jax.ShapeDtypeStruct((B, H, T, hd), q.dtype),
        grid_spec=pltpu.PrefetchScalarGridSpec(
            num_scalar_prefetch=0,
            grid=(B, H),
            in_specs=[spec, spec, spec],
            out_specs=pl.BlockSpec((None, None, T, hd), lambda b, h: (b, h, 0, 0)),
        ),
        compiler_params=pltpu.CompilerParams(
            dimension_semantics=("parallel", "parallel")),
    )(q, k, v)


# ---------------------------------------------------------------------------
# Fused residual add + LayerNorm (post-norm, eps = 1e-5 as in PyTorch).
# ---------------------------------------------------------------------------
def _add_ln_kernel(x_ref, res_ref, g_ref, b_ref, o_ref, *, eps):
    x = x_ref[...].astype(jnp.float32) + res_ref[...].astype(jnp.float32)
    mean = jnp.mean(x, axis=-1, keepdims=True)
    var = jnp.mean(jnp.square(x - mean), axis=-1, keepdims=True)
    xhat = (x - mean) * lax.rsqrt(var + eps)
    y = xhat * g_ref[...].astype(jnp.float32) + b_ref[...].astype(jnp.float32)
    o_ref[...] = y.astype(o_ref.dtype)


def add_layernorm(x, res, gamma, beta, eps=1e-5):
    M, D = x.shape
    tm = _pick_tile(M, (512, 256, 128))
    row_spec = pl.BlockSpec((tm, D), lambda i: (i, 0))
    par_spec = pl.BlockSpec((1, D), lambda i: (0, 0))
    return pl.pallas_call(
        functools.partial(_add_ln_kernel, eps=eps),
        out_shape=jax.ShapeDtypeStruct((M, D), x.dtype),
        grid_spec=pltpu.PrefetchScalarGridSpec(
            num_scalar_prefetch=0,
            grid=(M // tm,),
            in_specs=[row_spec, row_spec, par_spec, par_spec],
            out_specs=pl.BlockSpec((tm, D), lambda i: (i, 0)),
        ),
        compiler_params=pltpu.CompilerParams(
            dimension_semantics=("parallel",)),
    )(x, res, gamma, beta)


# ---------------------------------------------------------------------------
# Full forward pass (inference).
# ---------------------------------------------------------------------------
@functools.partial(jax.jit, static_argnames=("nhead", "activation"))
def transformer_encoder_forward(hidden_feature, params, nhead, activation):
    B, T, Din = hidden_feature.shape
    x = hidden_feature.reshape(B * T, Din)

    # bottleneck nn.Linear(input_dim, feature_dim)
    h = linear(x, params["bottleneck_w"], params["bottleneck_b"])
    D = h.shape[-1]
    hd = D // nhead

    # TODO(synk): positional encoding branch not implemented (cfg.positional_encoding.type == 'none').

    for lp in params["layers"]:
        # --- multi-head self-attention ---
        qkv = linear(h, lp["in_proj_w"], lp["in_proj_b"])          # [M, 3D]
        q, k, v = jnp.split(qkv, 3, axis=-1)

        def to_heads(t):
            return t.reshape(B, T, nhead, hd).transpose(0, 2, 1, 3)  # [B,H,T,hd]

        o = attention(to_heads(q), to_heads(k), to_heads(v))
        o = o.transpose(0, 2, 1, 3).reshape(B * T, D)
        attn_out = linear(o, lp["out_proj_w"], lp["out_proj_b"])
        h = add_layernorm(attn_out, h, lp["ln1_g"], lp["ln1_b"])

        # --- feed-forward ---
        ff = linear(h, lp["ff1_w"], lp["ff1_b"], activation=activation)
        ff = linear(ff, lp["ff2_w"], lp["ff2_b"])
        h = add_layernorm(ff, h, lp["ln2_g"], lp["ln2_b"])

    return h.reshape(B, T, D)


# ---------------------------------------------------------------------------
# Plain-JAX reference (same math) for correctness checking.
# ---------------------------------------------------------------------------
def reference_forward(hidden_feature, params, nhead, activation):
    B, T, Din = hidden_feature.shape
    x = hidden_feature.reshape(B * T, Din)
    h = x @ params["bottleneck_w"] + params["bottleneck_b"]
    D = h.shape[-1]
    hd = D // nhead

    def act(y):
        if activation == "relu":
            return jnp.maximum(y, 0.0)
        c = math.sqrt(2.0 / math.pi)
        return 0.5 * y * (1.0 + jnp.tanh(c * (y + 0.044715 * y ** 3)))

    def ln(y, g, b, eps=1e-5):
        m = jnp.mean(y, -1, keepdims=True)
        v = jnp.mean((y - m) ** 2, -1, keepdims=True)
        return (y - m) / jnp.sqrt(v + eps) * g + b

    for lp in params["layers"]:
        qkv = h @ lp["in_proj_w"] + lp["in_proj_b"]
        q, k, v = jnp.split(qkv, 3, axis=-1)

        def heads(t):
            return t.reshape(B, T, nhead, hd).transpose(0, 2, 1, 3)

        qh, kh, vh = heads(q), heads(k), heads(v)
        s = jnp.einsum("bhqd,bhkd->bhqk", qh, kh) / math.sqrt(hd)
        p = jax.nn.softmax(s, axis=-1)
        o = jnp.einsum("bhqk,bhkd->bhqd", p, vh).transpose(0, 2, 1, 3)
        o = o.reshape(B * T, D)
        h = ln(h + (o @ lp["out_proj_w"] + lp["out_proj_b"]),
               lp["ln1_g"], lp["ln1_b"])
        ff = act(h @ lp["ff1_w"] + lp["ff1_b"]) @ lp["ff2_w"] + lp["ff2_b"]
        h = ln(h + ff, lp["ln2_g"], lp["ln2_b"])
    return h.reshape(B, T, D)


if __name__ == "__main__":
    # Small shapes consistent with the module: hidden_feature [B, T, input_dim],
    # feature_dim after the bottleneck, nhead heads, dim_feedforward = feature_dim.
    B, T = 2, 8
    input_dim = 32
    feature_dim = 32
    nhead = 4
    num_layers = 2
    dim_ff = feature_dim          # dim_factor (PE = None) * feature_dim
    activation = "gelu"

    key = jax.random.PRNGKey(0)

    def uinit(k, shape, fan_in):
        bound = 1.0 / math.sqrt(fan_in)
        return jax.random.uniform(k, shape, minval=-bound, maxval=bound,
                                  dtype=jnp.float32)

    keys = iter(jax.random.split(key, 64))

    params = {
        "bottleneck_w": uinit(next(keys), (input_dim, feature_dim), input_dim),
        "bottleneck_b": uinit(next(keys), (1, feature_dim), input_dim),
        "layers": [],
    }
    D = feature_dim
    for _ in range(num_layers):
        params["layers"].append({
            "in_proj_w": uinit(next(keys), (D, 3 * D), D),
            "in_proj_b": uinit(next(keys), (1, 3 * D), D),
            "out_proj_w": uinit(next(keys), (D, D), D),
            "out_proj_b": uinit(next(keys), (1, D), D),
            "ln1_g": jnp.ones((1, D), jnp.float32),
            "ln1_b": jnp.zeros((1, D), jnp.float32),
            "ff1_w": uinit(next(keys), (D, dim_ff), D),
            "ff1_b": uinit(next(keys), (1, dim_ff), D),
            "ff2_w": uinit(next(keys), (dim_ff, D), dim_ff),
            "ff2_b": uinit(next(keys), (1, D), dim_ff),
            "ln2_g": jnp.ones((1, D), jnp.float32),
            "ln2_b": jnp.zeros((1, D), jnp.float32),
        })

    hidden_feature = jax.random.normal(next(keys), (B, T, input_dim),
                                       dtype=jnp.float32)

    out = transformer_encoder_forward(hidden_feature, params,
                                      nhead=nhead, activation=activation)
    out = jax.block_until_ready(out)

    ref = reference_forward(hidden_feature, params, nhead, activation)
    assert out.shape == (B, T, feature_dim)
    assert jnp.allclose(out, ref, atol=1e-4, rtol=1e-4), (
        float(jnp.max(jnp.abs(out - ref))))

    print("KERNEL_OK")
</pallas_src>

<mosaic_0001>
module attributes {stable_mosaic.version = 11 : i64} {
  func.func @_matmul_bias_kernel(%arg0: i32, %arg1: i32, %arg2: i32, %arg3: memref<16x32xf32, #tpu.memory_space<vmem>>, %arg4: memref<32x96xf32, #tpu.memory_space<vmem>>, %arg5: memref<1x96xf32, #tpu.memory_space<vmem>>, %arg6: memref<16x96xf32, #tpu.memory_space<vmem>>, %arg7: memref<16x96xf32, #tpu.memory_space<vmem>>) attributes {dimension_semantics = [#tpu.dimension_semantics<parallel>, #tpu.dimension_semantics<parallel>, #tpu.dimension_semantics<arbitrary>], iteration_bounds = array<i64: 1, 1, 1>, scalar_prefetch = 0 : i64, scratch_operands = 1 : i64, tpu.core_type = #tpu.core_type<tc>, window_params = [{transform_indices = @transform_0, window_bounds = array<i64: 16, 32>}, {transform_indices = @transform_1, window_bounds = array<i64: 32, 96>}, {transform_indices = @transform_2, window_bounds = array<i64: 1, 96>}, {transform_indices = @transform_3, window_bounds = array<i64: 16, 96>}]} {
    %c0_i32 = arith.constant 0 : i32
    %0 = arith.cmpi eq, %arg2, %c0_i32 : i32
    %1 = arith.extui %0 : i1 to i32
    %c0_i32_0 = arith.constant 0 : i32
    %2 = arith.cmpi ne, %1, %c0_i32_0 : i32
    scf.if %2 {
      %cst_10 = arith.constant 0.000000e+00 : f32
      %12 = vector.broadcast %cst_10 : f32 to vector<16x96xf32>
      %c0_11 = arith.constant 0 : index
      %c0_12 = arith.constant 0 : index
      %13 = vector.load %arg7[%c0_11, %c0_12] : memref<16x96xf32, #tpu.memory_space<vmem>>, vector<16x96xf32>
      tpu.vector_store %arg7[%c0_11, %c0_12], %12 {strides = array<i32>} : memref<16x96xf32, #tpu.memory_space<vmem>>, vector<16x96xf32>,
    } else {
    }
    %c0 = arith.constant 0 : index
    %c0_1 = arith.constant 0 : index
    %3 = vector.load %arg7[%c0, %c0_1] : memref<16x96xf32, #tpu.memory_space<vmem>>, vector<16x96xf32>
    %c0_2 = arith.constant 0 : index
    %c0_3 = arith.constant 0 : index
    %4 = vector.load %arg3[%c0_2, %c0_3] : memref<16x32xf32, #tpu.memory_space<vmem>>, vector<16x32xf32>
    %c0_4 = arith.constant 0 : index
    %c0_5 = arith.constant 0 : index
    %5 = vector.load %arg4[%c0_4, %c0_5] : memref<32x96xf32, #tpu.memory_space<vmem>>, vector<32x96xf32>
    %cst = arith.constant dense<0.000000e+00> : vector<16x96xf32>
    %6 = tpu.matmul %4, %5, %cst {dimension_numbers = #tpu.dot_dimension_numbers<[1], [0], [0], [1], [0, 0, 1, 1], [], []>} : vector<16x32xf32>, vector<32x96xf32>, vector<16x96xf32> -> vector<16x96xf32>
    %7 = arith.addf %3, %6 : vector<16x96xf32>
    %c0_6 = arith.constant 0 : index
    %c0_7 = arith.constant 0 : index
    %8 = vector.load %arg7[%c0_6, %c0_7] : memref<16x96xf32, #tpu.memory_space<vmem>>, vector<16x96xf32>
    tpu.vector_store %arg7[%c0_6, %c0_7], %7 {strides = array<i32>} : memref<16x96xf32, #tpu.memory_space<vmem>>, vector<16x96xf32>,
    %c0_i32_8 = arith.constant 0 : i32
    %9 = arith.cmpi eq, %arg2, %c0_i32_8 : i32
    %10 = arith.extui %9 : i1 to i32
    %c0_i32_9 = arith.constant 0 : i32
    %11 = arith.cmpi ne, %10, %c0_i32_9 : i32
    scf.if %11 {
      %c0_10 = arith.constant 0 : index
      %c0_11 = arith.constant 0 : index
      %12 = vector.load %arg7[%c0_10, %c0_11] : memref<16x96xf32, #tpu.memory_space<vmem>>, vector<16x96xf32>
      %c0_12 = arith.constant 0 : index
      %c0_13 = arith.constant 0 : index
      %13 = vector.load %arg5[%c0_12, %c0_13] : memref<1x96xf32, #tpu.memory_space<vmem>>, vector<1x96xf32>
      %14 = vector.broadcast %13 : vector<1x96xf32> to vector<16x96xf32>
      %15 = arith.addf %12, %14 : vector<16x96xf32>
      %c0_14 = arith.constant 0 : index
      %c0_15 = arith.constant 0 : index
      %16 = vector.load %arg6[%c0_14, %c0_15] : memref<16x96xf32, #tpu.memory_space<vmem>>, vector<16x96xf32>
      tpu.vector_store %arg6[%c0_14, %c0_15], %15 {strides = array<i32>} : memref<16x96xf32, #tpu.memory_space<vmem>>, vector<16x96xf32>,
    } else {
    }
    return
  }
  func.func @transform_0(%arg0: i32, %arg1: i32, %arg2: i32) -> (i32, i32) {
    %c0_i32 = arith.constant 0 : i32
    return %arg0, %arg2 : i32, i32
  }
  func.func @transform_1(%arg0: i32, %arg1: i32, %arg2: i32) -> (i32, i32) {
    %c0_i32 = arith.constant 0 : i32
    return %arg2, %arg1 : i32, i32
  }
  func.func @transform_2(%arg0: i32, %arg1: i32, %arg2: i32) -> (i32, i32) {
    %c0_i32 = arith.constant 0 : i32
    %c0_i32_0 = arith.constant 0 : i32
    return %c0_i32, %arg1 : i32, i32
  }
  func.func @transform_3(%arg0: i32, %arg1: i32, %arg2: i32) -> (i32, i32) {
    %c0_i32 = arith.constant 0 : i32
    return %arg0, %arg1 : i32, i32
  }
}

module attributes {stable_mosaic.version = 11 : i64} {
  func.func @_matmul_bias_kernel(%arg0: i32, %arg1: i32, %arg2: i32, %arg3: memref<16x32xf32, #tpu.memory_space<vmem>>, %arg4: memref<32x32xf32, #tpu.memory_space<vmem>>, %arg5: memref<1x32xf32, #tpu.memory_space<vmem>>, %arg6: memref<16x32xf32, #tpu.memory_space<vmem>>, %arg7: memref<16x32xf32, #tpu.memory_space<vmem>>) attributes {dimension_semantics = [#tpu.dimension_semantics<parallel>, #tpu.dimension_semantics<parallel>, #tpu.dimension_semantics<arbitrary>], iteration_bounds = array<i64: 1, 1, 1>, scalar_prefetch = 0 : i64, scratch_operands = 1 : i64, tpu.core_type = #tpu.core_type<tc>, window_params = [{transform_indices = @transform_0, window_bounds = array<i64: 16, 32>}, {transform_indices = @transform_1, window_bounds = array<i64: 32, 32>}, {transform_indices = @transform_2, window_bounds = array<i64: 1, 32>}, {transform_indices = @transform_3, window_bounds = array<i64: 16, 32>}]} {
    %c0_i32 = arith.constant 0 : i32
    %0 = arith.cmpi eq, %arg2, %c0_i32 : i32
    %1 = arith.extui %0 : i1 to i32
    %c0_i32_0 = arith.constant 0 : i32
    %2 = arith.cmpi ne, %1, %c0_i32_0 : i32
    scf.if %2 {
      %cst_10 = arith.constant 0.000000e+00 : f32
      %12 = vector.broadcast %cst_10 : f32 to vector<16x32xf32>
      %c0_11 = arith.constant 0 : index
      %c0_12 = arith.constant 0 : index
      %13 = vector.load %arg7[%c0_11, %c0_12] : memref<16x32xf32, #tpu.memory_space<vmem>>, vector<16x32xf32>
      tpu.vector_store %arg7[%c0_11, %c0_12], %12 {strides = array<i32>} : memref<16x32xf32, #tpu.memory_space<vmem>>, vector<16x32xf32>,
    } else {
    }
    %c0 = arith.constant 0 : index
    %c0_1 = arith.constant 0 : index
    %3 = vector.load %arg7[%c0, %c0_1] : memref<16x32xf32, #tpu.memory_space<vmem>>, vector<16x32xf32>
    %c0_2 = arith.constant 0 : index
    %c0_3 = arith.constant 0 : index
    %4 = vector.load %arg3[%c0_2, %c0_3] : memref<16x32xf32, #tpu.memory_space<vmem>>, vector<16x32xf32>
    %c0_4 = arith.constant 0 : index
    %c0_5 = arith.constant 0 : index
    %5 = vector.load %arg4[%c0_4, %c0_5] : memref<32x32xf32, #tpu.memory_space<vmem>>, vector<32x32xf32>
    %cst = arith.constant dense<0.000000e+00> : vector<16x32xf32>
    %6 = tpu.matmul %4, %5, %cst {dimension_numbers = #tpu.dot_dimension_numbers<[1], [0], [0], [1], [0, 0, 1, 1], [], []>} : vector<16x32xf32>, vector<32x32xf32>, vector<16x32xf32> -> vector<16x32xf32>
    %7 = arith.addf %3, %6 : vector<16x32xf32>
    %c0_6 = arith.constant 0 : index
    %c0_7 = arith.constant 0 : index
    %8 = vector.load %arg7[%c0_6, %c0_7] : memref<16x32xf32, #tpu.memory_space<vmem>>, vector<16x32xf32>
    tpu.vector_store %arg7[%c0_6, %c0_7], %7 {strides = array<i32>} : memref<16x32xf32, #tpu.memory_space<vmem>>, vector<16x32xf32>,
    %c0_i32_8 = arith.constant 0 : i32
    %9 = arith.cmpi eq, %arg2, %c0_i32_8 : i32
    %10 = arith.extui %9 : i1 to i32
    %c0_i32_9 = arith.constant 0 : i32
    %11 = arith.cmpi ne, %10, %c0_i32_9 : i32
    scf.if %11 {
      %c0_10 = arith.constant 0 : index
      %c0_11 = arith.constant 0 : index
      %12 = vector.load %arg7[%c0_10, %c0_11] : memref<16x32xf32, #tpu.memory_space<vmem>>, vector<16x32xf32>
      %c0_12 = arith.constant 0 : index
      %c0_13 = arith.constant 0 : index
      %13 = vector.load %arg5[%c0_12, %c0_13] : memref<1x32xf32, #tpu.memory_space<vmem>>, vector<1x32xf32>
      %14 = vector.broadcast %13 : vector<1x32xf32> to vector<16x32xf32>
      %15 = arith.addf %12, %14 : vector<16x32xf32>
      %c0_14 = arith.constant 0 : index
      %c0_15 = arith.constant 0 : index
      %16 = vector.load %arg6[%c0_14, %c0_15] : memref<16x32xf32, #tpu.memory_space<vmem>>, vector<16x32xf32>
      tpu.vector_store %arg6[%c0_14, %c0_15], %15 {strides = array<i32>} : memref<16x32xf32, #tpu.memory_space<vmem>>, vector<16x32xf32>,
    } else {
    }
    return
  }
  func.func @transform_0(%arg0: i32, %arg1: i32, %arg2: i32) -> (i32, i32) {
    %c0_i32 = arith.constant 0 : i32
    return %arg0, %arg2 : i32, i32
  }
  func.func @transform_1(%arg0: i32, %arg1: i32, %arg2: i32) -> (i32, i32) {
    %c0_i32 = arith.constant 0 : i32
    return %arg2, %arg1 : i32, i32
  }
  func.func @transform_2(%arg0: i32, %arg1: i32, %arg2: i32) -> (i32, i32) {
    %c0_i32 = arith.constant 0 : i32
    %c0_i32_0 = arith.constant 0 : i32
    return %c0_i32, %arg1 : i32, i32
  }
  func.func @transform_3(%arg0: i32, %arg1: i32, %arg2: i32) -> (i32, i32) {
    %c0_i32 = arith.constant 0 : i32
    return %arg0, %arg1 : i32, i32
  }
}

module attributes {stable_mosaic.version = 11 : i64} {
  func.func @_attention_kernel(%arg0: i32, %arg1: i32, %arg2: memref<1x1x8x8xf32, #tpu.memory_space<vmem>>, %arg3: memref<1x1x8x8xf32, #tpu.memory_space<vmem>>, %arg4: memref<1x1x8x8xf32, #tpu.memory_space<vmem>>, %arg5: memref<1x1x8x8xf32, #tpu.memory_space<vmem>>) attributes {dimension_semantics = [#tpu.dimension_semantics<parallel>, #tpu.dimension_semantics<parallel>], iteration_bounds = array<i64: 2, 4>, scalar_prefetch = 0 : i64, scratch_operands = 0 : i64, tpu.core_type = #tpu.core_type<tc>, window_params = [{transform_indices = @transform_0, window_bounds = array<i64: 1, 1, 8, 8>}, {transform_indices = @transform_1, window_bounds = array<i64: 1, 1, 8, 8>}, {transform_indices = @transform_2, window_bounds = array<i64: 1, 1, 8, 8>}, {transform_indices = @transform_3, window_bounds = array<i64: 1, 1, 8, 8>}]} {
    %c0 = arith.constant 0 : index
    %c0_0 = arith.constant 0 : index
    %c0_1 = arith.constant 0 : index
    %c0_2 = arith.constant 0 : index
    %0 = vector.load %arg2[%c0, %c0_0, %c0_1, %c0_2] : memref<1x1x8x8xf32, #tpu.memory_space<vmem>>, vector<1x1x8x8xf32>
    %1 = vector.shape_cast %0 : vector<1x1x8x8xf32> to vector<8x8xf32>
    %c0_3 = arith.constant 0 : index
    %c0_4 = arith.constant 0 : index
    %c0_5 = arith.constant 0 : index
    %c0_6 = arith.constant 0 : index
    %2 = vector.load %arg3[%c0_3, %c0_4, %c0_5, %c0_6] : memref<1x1x8x8xf32, #tpu.memory_space<vmem>>, vector<1x1x8x8xf32>
    %3 = vector.shape_cast %2 : vector<1x1x8x8xf32> to vector<8x8xf32>
    %c0_7 = arith.constant 0 : index
    %c0_8 = arith.constant 0 : index
    %c0_9 = arith.constant 0 : index
    %c0_10 = arith.constant 0 : index
    %4 = vector.load %arg4[%c0_7, %c0_8, %c0_9, %c0_10] : memref<1x1x8x8xf32, #tpu.memory_space<vmem>>, vector<1x1x8x8xf32>
    %5 = vector.shape_cast %4 : vector<1x1x8x8xf32> to vector<8x8xf32>
    %6 = tpu.transpose %3, [1, 0] : vector<8x8xf32> -> vector<8x8xf32>
    %cst = arith.constant dense<0.000000e+00> : vector<8x8xf32>
    %7 = tpu.matmul %1, %6, %cst {dimension_numbers = #tpu.dot_dimension_numbers<[1], [0], [0], [1], [0, 0, 1, 1], [], []>} : vector<8x8xf32>, vector<8x8xf32>, vector<8x8xf32> -> vector<8x8xf32>
    %cst_11 = arith.constant 0.353553385 : f32
    %8 = vector.broadcast %cst_11 : f32 to vector<8x8xf32>
    %9 = arith.mulf %7, %8 : vector<8x8xf32>
    %cst_12 = arith.constant dense<0xFF800000> : vector<8xf32>
    %10 = vector.multi_reduction <maximumf>, %9, %cst_12 [1] : vector<8x8xf32> to vector<8xf32>
    %11 = vector.shape_cast %10 : vector<8xf32> to vector<8x1xf32>
    %12 = vector.broadcast %11 : vector<8x1xf32> to vector<8x8xf32>
    %13 = arith.subf %9, %12 : vector<8x8xf32>
    %14 = math.exp %13 : vector<8x8xf32>
    %cst_13 = arith.constant dense<0.000000e+00> : vector<8xf32>
    %15 = vector.multi_reduction <add>, %14, %cst_13 [1] : vector<8x8xf32> to vector<8xf32>
    %16 = vector.shape_cast %15 : vector<8xf32> to vector<8x1xf32>
    %cst_14 = arith.constant dense<0.000000e+00> : vector<8x8xf32>
    %17 = tpu.matmul %14, %5, %cst_14 {dimension_numbers = #tpu.dot_dimension_numbers<[1], [0], [0], [1], [0, 0, 1, 1], [], []>} : vector<8x8xf32>, vector<8x8xf32>, vector<8x8xf32> -> vector<8x8xf32>
    %18 = vector.broadcast %16 : vector<8x1xf32> to vector<8x8xf32>
    %19 = arith.divf %17, %18 : vector<8x8xf32>
    %c0_15 = arith.constant 0 : index
    %c0_16 = arith.constant 0 : index
    %c0_17 = arith.constant 0 : index
    %c0_18 = arith.constant 0 : index
    %20 = vector.load %arg5[%c0_15, %c0_16, %c0_17, %c0_18] : memref<1x1x8x8xf32, #tpu.memory_space<vmem>>, vector<1x1x8x8xf32>
    %21 = vector.shape_cast %20 : vector<1x1x8x8xf32> to vector<8x8xf32>
    %22 = vector.shape_cast %19 : vector<8x8xf32> to vector<1x1x8x8xf32>
    tpu.vector_store %arg5[%c0_15, %c0_16, %c0_17, %c0_18], %22 {strides = array<i32>} : memref<1x1x8x8xf32, #tpu.memory_space<vmem>>, vector<1x1x8x8xf32>,
    return
  }
  func.func @transform_0(%arg0: i32, %arg1: i32) -> (i32, i32, i32, i32) {
    %c0_i32 = arith.constant 0 : i32
    %c0_i32_0 = arith.constant 0 : i32
    %c0_i32_1 = arith.constant 0 : i32
    return %arg0, %arg1, %c0_i32, %c0_i32_0 : i32, i32, i32, i32
  }
  func.func @transform_1(%arg0: i32, %arg1: i32) -> (i32, i32, i32, i32) {
    %c0_i32 = arith.constant 0 : i32
    %c0_i32_0 = arith.constant 0 : i32
    %c0_i32_1 = arith.constant 0 : i32
    return %arg0, %arg1, %c0_i32, %c0_i32_0 : i32, i32, i32, i32
  }
  func.func @transform_2(%arg0: i32, %arg1: i32) -> (i32, i32, i32, i32) {
    %c0_i32 = arith.constant 0 : i32
    %c0_i32_0 = arith.constant 0 : i32
    %c0_i32_1 = arith.constant 0 : i32
    return %arg0, %arg1, %c0_i32, %c0_i32_0 : i32, i32, i32, i32
  }
  func.func @transform_3(%arg0: i32, %arg1: i32) -> (i32, i32, i32, i32) {
    %c0_i32 = arith.constant 0 : i32
    %c0_i32_0 = arith.constant 0 : i32
    %c0_i32_1 = arith.constant 0 : i32
    return %arg0, %arg1, %c0_i32, %c0_i32_0 : i32, i32, i32, i32
  }
}

module attributes {stable_mosaic.version = 11 : i64} {
  func.func @_matmul_bias_kernel(%arg0: i32, %arg1: i32, %arg2: i32, %arg3: memref<16x32xf32, #tpu.memory_space<vmem>>, %arg4: memref<32x32xf32, #tpu.memory_space<vmem>>, %arg5: memref<1x32xf32, #tpu.memory_space<vmem>>, %arg6: memref<16x32xf32, #tpu.memory_space<vmem>>, %arg7: memref<16x32xf32, #tpu.memory_space<vmem>>) attributes {dimension_semantics = [#tpu.dimension_semantics<parallel>, #tpu.dimension_semantics<parallel>, #tpu.dimension_semantics<arbitrary>], iteration_bounds = array<i64: 1, 1, 1>, scalar_prefetch = 0 : i64, scratch_operands = 1 : i64, tpu.core_type = #tpu.core_type<tc>, window_params = [{transform_indices = @transform_0, window_bounds = array<i64: 16, 32>}, {transform_indices = @transform_1, window_bounds = array<i64: 32, 32>}, {transform_indices = @transform_2, window_bounds = array<i64: 1, 32>}, {transform_indices = @transform_3, window_bounds = array<i64: 16, 32>}]} {
    %c0_i32 = arith.constant 0 : i32
    %0 = arith.cmpi eq, %arg2, %c0_i32 : i32
    %1 = arith.extui %0 : i1 to i32
    %c0_i32_0 = arith.constant 0 : i32
    %2 = arith.cmpi ne, %1, %c0_i32_0 : i32
    scf.if %2 {
      %cst_10 = arith.constant 0.000000e+00 : f32
      %12 = vector.broadcast %cst_10 : f32 to vector<16x32xf32>
      %c0_11 = arith.constant 0 : index
      %c0_12 = arith.constant 0 : index
      %13 = vector.load %arg7[%c0_11, %c0_12] : memref<16x32xf32, #tpu.memory_space<vmem>>, vector<16x32xf32>
      tpu.vector_store %arg7[%c0_11, %c0_12], %12 {strides = array<i32>} : memref<16x32xf32, #tpu.memory_space<vmem>>, vector<16x32xf32>,
    } else {
    }
    %c0 = arith.constant 0 : index
    %c0_1 = arith.constant 0 : index
    %3 = vector.load %arg7[%c0, %c0_1] : memref<16x32xf32, #tpu.memory_space<vmem>>, vector<16x32xf32>
    %c0_2 = arith.constant 0 : index
    %c0_3 = arith.constant 0 : index
    %4 = vector.load %arg3[%c0_2, %c0_3] : memref<16x32xf32, #tpu.memory_space<vmem>>, vector<16x32xf32>
    %c0_4 = arith.constant 0 : index
    %c0_5 = arith.constant 0 : index
    %5 = vector.load %arg4[%c0_4, %c0_5] : memref<32x32xf32, #tpu.memory_space<vmem>>, vector<32x32xf32>
    %cst = arith.constant dense<0.000000e+00> : vector<16x32xf32>
    %6 = tpu.matmul %4, %5, %cst {dimension_numbers = #tpu.dot_dimension_numbers<[1], [0], [0], [1], [0, 0, 1, 1], [], []>} : vector<16x32xf32>, vector<32x32xf32>, vector<16x32xf32> -> vector<16x32xf32>
    %7 = arith.addf %3, %6 : vector<16x32xf32>
    %c0_6 = arith.constant 0 : index
    %c0_7 = arith.constant 0 : index
    %8 = vector.load %arg7[%c0_6, %c0_7] : memref<16x32xf32, #tpu.memory_space<vmem>>, vector<16x32xf32>
    tpu.vector_store %arg7[%c0_6, %c0_7], %7 {strides = array<i32>} : memref<16x32xf32, #tpu.memory_space<vmem>>, vector<16x32xf32>,
    %c0_i32_8 = arith.constant 0 : i32
    %9 = arith.cmpi eq, %arg2, %c0_i32_8 : i32
    %10 = arith.extui %9 : i1 to i32
    %c0_i32_9 = arith.constant 0 : i32
    %11 = arith.cmpi ne, %10, %c0_i32_9 : i32
    scf.if %11 {
      %c0_10 = arith.constant 0 : index
      %c0_11 = arith.constant 0 : index
      %12 = vector.load %arg7[%c0_10, %c0_11] : memref<16x32xf32, #tpu.memory_space<vmem>>, vector<16x32xf32>
      %c0_12 = arith.constant 0 : index
      %c0_13 = arith.constant 0 : index
      %13 = vector.load %arg5[%c0_12, %c0_13] : memref<1x32xf32, #tpu.memory_space<vmem>>, vector<1x32xf32>
      %14 = vector.broadcast %13 : vector<1x32xf32> to vector<16x32xf32>
      %15 = arith.addf %12, %14 : vector<16x32xf32>
      %c0_14 = arith.constant 0 : index
      %c0_15 = arith.constant 0 : index
      %16 = vector.load %arg6[%c0_14, %c0_15] : memref<16x32xf32, #tpu.memory_space<vmem>>, vector<16x32xf32>
      tpu.vector_store %arg6[%c0_14, %c0_15], %15 {strides = array<i32>} : memref<16x32xf32, #tpu.memory_space<vmem>>, vector<16x32xf32>,
    } else {
    }
    return
  }
  func.func @transform_0(%arg0: i32, %arg1: i32, %arg2: i32) -> (i32, i32) {
    %c0_i32 = arith.constant 0 : i32
    return %arg0, %arg2 : i32, i32
  }
  func.func @transform_1(%arg0: i32, %arg1: i32, %arg2: i32) -> (i32, i32) {
    %c0_i32 = arith.constant 0 : i32
    return %arg2, %arg1 : i32, i32
  }
  func.func @transform_2(%arg0: i32, %arg1: i32, %arg2: i32) -> (i32, i32) {
    %c0_i32 = arith.constant 0 : i32
    %c0_i32_0 = arith.constant 0 : i32
    return %c0_i32, %arg1 : i32, i32
  }
  func.func @transform_3(%arg0: i32, %arg1: i32, %arg2: i32) -> (i32, i32) {
    %c0_i32 = arith.constant 0 : i32
    return %arg0, %arg1 : i32, i32
  }
}

module attributes {stable_mosaic.version = 11 : i64} {
  func.func @_add_ln_kernel(%arg0: i32, %arg1: memref<16x32xf32, #tpu.memory_space<vmem>>, %arg2: memref<16x32xf32, #tpu.memory_space<vmem>>, %arg3: memref<1x32xf32, #tpu.memory_space<vmem>>, %arg4: memref<1x32xf32, #tpu.memory_space<vmem>>, %arg5: memref<16x32xf32, #tpu.memory_space<vmem>>) attributes {dimension_semantics = [#tpu.dimension_semantics<parallel>], iteration_bounds = array<i64: 1>, scalar_prefetch = 0 : i64, scratch_operands = 0 : i64, tpu.core_type = #tpu.core_type<tc>, window_params = [{transform_indices = @transform_0, window_bounds = array<i64: 16, 32>}, {transform_indices = @transform_1, window_bounds = array<i64: 16, 32>}, {pipeline_mode = #tpu.pipeline_mode<synchronous>, transform_indices = @transform_2, window_bounds = array<i64: 1, 32>}, {pipeline_mode = #tpu.pipeline_mode<synchronous>, transform_indices = @transform_3, window_bounds = array<i64: 1, 32>}, {transform_indices = @transform_4, window_bounds = array<i64: 16, 32>}]} {
    %c0 = arith.constant 0 : index
    %c0_0 = arith.constant 0 : index
    %0 = vector.load %arg1[%c0, %c0_0] : memref<16x32xf32, #tpu.memory_space<vmem>>, vector<16x32xf32>
    %c0_1 = arith.constant 0 : index
    %c0_2 = arith.constant 0 : index
    %1 = vector.load %arg2[%c0_1, %c0_2] : memref<16x32xf32, #tpu.memory_space<vmem>>, vector<16x32xf32>
    %2 = arith.addf %0, %1 : vector<16x32xf32>
    %cst = arith.constant dense<0.000000e+00> : vector<16xf32>
    %3 = vector.multi_reduction <add>, %2, %cst [1] : vector<16x32xf32> to vector<16xf32>
    %4 = vector.shape_cast %3 : vector<16xf32> to vector<16x1xf32>
    %cst_3 = arith.constant 3.200000e+01 : f32
    %5 = vector.broadcast %cst_3 : f32 to vector<16x1xf32>
    %6 = arith.divf %4, %5 : vector<16x1xf32>
    %7 = vector.broadcast %6 : vector<16x1xf32> to vector<16x32xf32>
    %8 = arith.subf %2, %7 : vector<16x32xf32>
    %9 = arith.mulf %8, %8 : vector<16x32xf32>
    %cst_4 = arith.constant dense<0.000000e+00> : vector<16xf32>
    %10 = vector.multi_reduction <add>, %9, %cst_4 [1] : vector<16x32xf32> to vector<16xf32>
    %11 = vector.shape_cast %10 : vector<16xf32> to vector<16x1xf32>
    %cst_5 = arith.constant 3.200000e+01 : f32
    %12 = vector.broadcast %cst_5 : f32 to vector<16x1xf32>
    %13 = arith.divf %11, %12 : vector<16x1xf32>
    %14 = vector.broadcast %6 : vector<16x1xf32> to vector<16x32xf32>
    %15 = arith.subf %2, %14 : vector<16x32xf32>
    %cst_6 = arith.constant 9.99999974E-6 : f32
    %16 = vector.broadcast %cst_6 : f32 to vector<16x1xf32>
    %17 = arith.addf %13, %16 : vector<16x1xf32>
    %18 = math.rsqrt %17 : vector<16x1xf32>
    %19 = vector.broadcast %18 : vector<16x1xf32> to vector<16x32xf32>
    %20 = arith.mulf %15, %19 : vector<16x32xf32>
    %c0_7 = arith.constant 0 : index
    %c0_8 = arith.constant 0 : index
    %21 = vector.load %arg3[%c0_7, %c0_8] : memref<1x32xf32, #tpu.memory_space<vmem>>, vector<1x32xf32>
    %22 = vector.broadcast %21 : vector<1x32xf32> to vector<16x32xf32>
    %23 = arith.mulf %20, %22 : vector<16x32xf32>
    %c0_9 = arith.constant 0 : index
    %c0_10 = arith.constant 0 : index
    %24 = vector.load %arg4[%c0_9, %c0_10] : memref<1x32xf32, #tpu.memory_space<vmem>>, vector<1x32xf32>
    %25 = vector.broadcast %24 : vector<1x32xf32> to vector<16x32xf32>
    %26 = arith.addf %23, %25 : vector<16x32xf32>
    %c0_11 = arith.constant 0 : index
    %c0_12 = arith.constant 0 : index
    %27 = vector.load %arg5[%c0_11, %c0_12] : memref<16x32xf32, #tpu.memory_space<vmem>>, vector<16x32xf32>
    tpu.vector_store %arg5[%c0_11, %c0_12], %26 {strides = array<i32>} : memref<16x32xf32, #tpu.memory_space<vmem>>, vector<16x32xf32>,
    return
  }
  func.func @transform_0(%arg0: i32) -> (i32, i32) {
    %c0_i32 = arith.constant 0 : i32
    %c0_i32_0 = arith.constant 0 : i32
    return %arg0, %c0_i32 : i32, i32
  }
  func.func @transform_1(%arg0: i32) -> (i32, i32) {
    %c0_i32 = arith.constant 0 : i32
    %c0_i32_0 = arith.constant 0 : i32
    return %arg0, %c0_i32 : i32, i32
  }
  func.func @transform_2(%arg0: i32) -> (i32, i32) {
    %c0_i32 = arith.constant 0 : i32
    %c0_i32_0 = arith.constant 0 : i32
    %c0_i32_1 = arith.constant 0 : i32
    return %c0_i32, %c0_i32_0 : i32, i32
  }
  func.func @transform_3(%arg0: i32) -> (i32, i32) {
    %c0_i32 = arith.constant 0 : i32
    %c0_i32_0 = arith.constant 0 : i32
    %c0_i32_1 = arith.constant 0 : i32
    return %c0_i32, %c0_i32_0 : i32, i32
  }
  func.func @transform_4(%arg0: i32) -> (i32, i32) {
    %c0_i32 = arith.constant 0 : i32
    %c0_i32_0 = arith.constant 0 : i32
    return %arg0, %c0_i32 : i32, i32
  }
}

module attributes {stable_mosaic.version = 11 : i64} {
  func.func @_matmul_bias_kernel(%arg0: i32, %arg1: i32, %arg2: i32, %arg3: memref<16x32xf32, #tpu.memory_space<vmem>>, %arg4: memref<32x32xf32, #tpu.memory_space<vmem>>, %arg5: memref<1x32xf32, #tpu.memory_space<vmem>>, %arg6: memref<16x32xf32, #tpu.memory_space<vmem>>, %arg7: memref<16x32xf32, #tpu.memory_space<vmem>>) attributes {dimension_semantics = [#tpu.dimension_semantics<parallel>, #tpu.dimension_semantics<parallel>, #tpu.dimension_semantics<arbitrary>], iteration_bounds = array<i64: 1, 1, 1>, scalar_prefetch = 0 : i64, scratch_operands = 1 : i64, tpu.core_type = #tpu.core_type<tc>, window_params = [{transform_indices = @transform_0, window_bounds = array<i64: 16, 32>}, {transform_indices = @transform_1, window_bounds = array<i64: 32, 32>}, {transform_indices = @transform_2, window_bounds = array<i64: 1, 32>}, {transform_indices = @transform_3, window_bounds = array<i64: 16, 32>}]} {
    %c0_i32 = arith.constant 0 : i32
    %0 = arith.cmpi eq, %arg2, %c0_i32 : i32
    %1 = arith.extui %0 : i1 to i32
    %c0_i32_0 = arith.constant 0 : i32
    %2 = arith.cmpi ne, %1, %c0_i32_0 : i32
    scf.if %2 {
      %cst_10 = arith.constant 0.000000e+00 : f32
      %12 = vector.broadcast %cst_10 : f32 to vector<16x32xf32>
      %c0_11 = arith.constant 0 : index
      %c0_12 = arith.constant 0 : index
      %13 = vector.load %arg7[%c0_11, %c0_12] : memref<16x32xf32, #tpu.memory_space<vmem>>, vector<16x32xf32>
      tpu.vector_store %arg7[%c0_11, %c0_12], %12 {strides = array<i32>} : memref<16x32xf32, #tpu.memory_space<vmem>>, vector<16x32xf32>,
    } else {
    }
    %c0 = arith.constant 0 : index
    %c0_1 = arith.constant 0 : index
    %3 = vector.load %arg7[%c0, %c0_1] : memref<16x32xf32, #tpu.memory_space<vmem>>, vector<16x32xf32>
    %c0_2 = arith.constant 0 : index
    %c0_3 = arith.constant 0 : index
    %4 = vector.load %arg3[%c0_2, %c0_3] : memref<16x32xf32, #tpu.memory_space<vmem>>, vector<16x32xf32>
    %c0_4 = arith.constant 0 : index
    %c0_5 = arith.constant 0 : index
    %5 = vector.load %arg4[%c0_4, %c0_5] : memref<32x32xf32, #tpu.memory_space<vmem>>, vector<32x32xf32>
    %cst = arith.constant dense<0.000000e+00> : vector<16x32xf32>
    %6 = tpu.matmul %4, %5, %cst {dimension_numbers = #tpu.dot_dimension_numbers<[1], [0], [0], [1], [0, 0, 1, 1], [], []>} : vector<16x32xf32>, vector<32x32xf32>, vector<16x32xf32> -> vector<16x32xf32>
    %7 = arith.addf %3, %6 : vector<16x32xf32>
    %c0_6 = arith.constant 0 : index
    %c0_7 = arith.constant 0 : index
    %8 = vector.load %arg7[%c0_6, %c0_7] : memref<16x32xf32, #tpu.memory_space<vmem>>, vector<16x32xf32>
    tpu.vector_store %arg7[%c0_6, %c0_7], %7 {strides = array<i32>} : memref<16x32xf32, #tpu.memory_space<vmem>>, vector<16x32xf32>,
    %c0_i32_8 = arith.constant 0 : i32
    %9 = arith.cmpi eq, %arg2, %c0_i32_8 : i32
    %10 = arith.extui %9 : i1 to i32
    %c0_i32_9 = arith.constant 0 : i32
    %11 = arith.cmpi ne, %10, %c0_i32_9 : i32
    scf.if %11 {
      %c0_10 = arith.constant 0 : index
      %c0_11 = arith.constant 0 : index
      %12 = vector.load %arg7[%c0_10, %c0_11] : memref<16x32xf32, #tpu.memory_space<vmem>>, vector<16x32xf32>
      %c0_12 = arith.constant 0 : index
      %c0_13 = arith.constant 0 : index
      %13 = vector.load %arg5[%c0_12, %c0_13] : memref<1x32xf32, #tpu.memory_space<vmem>>, vector<1x32xf32>
      %14 = vector.broadcast %13 : vector<1x32xf32> to vector<16x32xf32>
      %15 = arith.addf %12, %14 : vector<16x32xf32>
      %cst_14 = arith.constant 5.000000e-01 : f32
      %16 = vector.broadcast %cst_14 : f32 to vector<16x32xf32>
      %17 = arith.mulf %16, %15 : vector<16x32xf32>
      %cst_15 = arith.constant 4.471500e-02 : f32
      %18 = vector.broadcast %cst_15 : f32 to vector<16x32xf32>
      %19 = arith.mulf %18, %15 : vector<16x32xf32>
      %20 = arith.mulf %19, %15 : vector<16x32xf32>
      %21 = arith.mulf %20, %15 : vector<16x32xf32>
      %22 = arith.addf %15, %21 : vector<16x32xf32>
      %cst_16 = arith.constant 0.797884583 : f32
      %23 = vector.broadcast %cst_16 : f32 to vector<16x32xf32>
      %24 = arith.mulf %23, %22 : vector<16x32xf32>
      %25 = math.tanh %24 : vector<16x32xf32>
      %cst_17 = arith.constant 1.000000e+00 : f32
      %26 = vector.broadcast %cst_17 : f32 to vector<16x32xf32>
      %27 = arith.addf %26, %25 : vector<16x32xf32>
      %28 = arith.mulf %17, %27 : vector<16x32xf32>
      %c0_18 = arith.constant 0 : index
      %c0_19 = arith.constant 0 : index
      %29 = vector.load %arg6[%c0_18, %c0_19] : memref<16x32xf32, #tpu.memory_space<vmem>>, vector<16x32xf32>
      tpu.vector_store %arg6[%c0_18, %c0_19], %28 {strides = array<i32>} : memref<16x32xf32, #tpu.memory_space<vmem>>, vector<16x32xf32>,
    } else {
    }
    return
  }
  func.func @transform_0(%arg0: i32, %arg1: i32, %arg2: i32) -> (i32, i32) {
    %c0_i32 = arith.constant 0 : i32
    return %arg0, %arg2 : i32, i32
  }
  func.func @transform_1(%arg0: i32, %arg1: i32, %arg2: i32) -> (i32, i32) {
    %c0_i32 = arith.constant 0 : i32
    return %arg2, %arg1 : i32, i32
  }
  func.func @transform_2(%arg0: i32, %arg1: i32, %arg2: i32) -> (i32, i32) {
    %c0_i32 = arith.constant 0 : i32
    %c0_i32_0 = arith.constant 0 : i32
    return %c0_i32, %arg1 : i32, i32
  }
  func.func @transform_3(%arg0: i32, %arg1: i32, %arg2: i32) -> (i32, i32) {
    %c0_i32 = arith.constant 0 : i32
    return %arg0, %arg1 : i32, i32
  }
}

module attributes {stable_mosaic.version = 11 : i64} {
  func.func @_add_ln_kernel(%arg0: i32, %arg1: memref<16x32xf32, #tpu.memory_space<vmem>>, %arg2: memref<16x32xf32, #tpu.memory_space<vmem>>, %arg3: memref<1x32xf32, #tpu.memory_space<vmem>>, %arg4: memref<1x32xf32, #tpu.memory_space<vmem>>, %arg5: memref<16x32xf32, #tpu.memory_space<vmem>>) attributes {dimension_semantics = [#tpu.dimension_semantics<parallel>], iteration_bounds = array<i64: 1>, scalar_prefetch = 0 : i64, scratch_operands = 0 : i64, tpu.core_type = #tpu.core_type<tc>, window_params = [{transform_indices = @transform_0, window_bounds = array<i64: 16, 32>}, {transform_indices = @transform_1, window_bounds = array<i64: 16, 32>}, {pipeline_mode = #tpu.pipeline_mode<synchronous>, transform_indices = @transform_2, window_bounds = array<i64: 1, 32>}, {pipeline_mode = #tpu.pipeline_mode<synchronous>, transform_indices = @transform_3, window_bounds = array<i64: 1, 32>}, {transform_indices = @transform_4, window_bounds = array<i64: 16, 32>}]} {
    %c0 = arith.constant 0 : index
    %c0_0 = arith.constant 0 : index
    %0 = vector.load %arg1[%c0, %c0_0] : memref<16x32xf32, #tpu.memory_space<vmem>>, vector<16x32xf32>
    %c0_1 = arith.constant 0 : index
    %c0_2 = arith.constant 0 : index
    %1 = vector.load %arg2[%c0_1, %c0_2] : memref<16x32xf32, #tpu.memory_space<vmem>>, vector<16x32xf32>
    %2 = arith.addf %0, %1 : vector<16x32xf32>
    %cst = arith.constant dense<0.000000e+00> : vector<16xf32>
    %3 = vector.multi_reduction <add>, %2, %cst [1] : vector<16x32xf32> to vector<16xf32>
    %4 = vector.shape_cast %3 : vector<16xf32> to vector<16x1xf32>
    %cst_3 = arith.constant 3.200000e+01 : f32
    %5 = vector.broadcast %cst_3 : f32 to vector<16x1xf32>
    %6 = arith.divf %4, %5 : vector<16x1xf32>
    %7 = vector.broadcast %6 : vector<16x1xf32> to vector<16x32xf32>
    %8 = arith.subf %2, %7 : vector<16x32xf32>
    %9 = arith.mulf %8, %8 : vector<16x32xf32>
    %cst_4 = arith.constant dense<0.000000e+00> : vector<16xf32>
    %10 = vector.multi_reduction <add>, %9, %cst_4 [1] : vector<16x32xf32> to vector<16xf32>
    %11 = vector.shape_cast %10 : vector<16xf32> to vector<16x1xf32>
    %cst_5 = arith.constant 3.200000e+01 : f32
    %12 = vector.broadcast %cst_5 : f32 to vector<16x1xf32>
    %13 = arith.divf %11, %12 : vector<16x1xf32>
    %14 = vector.broadcast %6 : vector<16x1xf32> to vector<16x32xf32>
    %15 = arith.subf %2, %14 : vector<16x32xf32>
    %cst_6 = arith.constant 9.99999974E-6 : f32
    %16 = vector.broadcast %cst_6 : f32 to vector<16x1xf32>
    %17 = arith.addf %13, %16 : vector<16x1xf32>
    %18 = math.rsqrt %17 : vector<16x1xf32>
    %19 = vector.broadcast %18 : vector<16x1xf32> to vector<16x32xf32>
    %20 = arith.mulf %15, %19 : vector<16x32xf32>
    %c0_7 = arith.constant 0 : index
    %c0_8 = arith.constant 0 : index
    %21 = vector.load %arg3[%c0_7, %c0_8] : memref<1x32xf32, #tpu.memory_space<vmem>>, vector<1x32xf32>
    %22 = vector.broadcast %21 : vector<1x32xf32> to vector<16x32xf32>
    %23 = arith.mulf %20, %22 : vector<16x32xf32>
    %c0_9 = arith.constant 0 : index
    %c0_10 = arith.constant 0 : index
    %24 = vector.load %arg4[%c0_9, %c0_10] : memref<1x32xf32, #tpu.memory_space<vmem>>, vector<1x32xf32>
    %25 = vector.broadcast %24 : vector<1x32xf32> to vector<16x32xf32>
    %26 = arith.addf %23, %25 : vector<16x32xf32>
    %c0_11 = arith.constant 0 : index
    %c0_12 = arith.constant 0 : index
    %27 = vector.load %arg5[%c0_11, %c0_12] : memref<16x32xf32, #tpu.memory_space<vmem>>, vector<16x32xf32>
    tpu.vector_store %arg5[%c0_11, %c0_12], %26 {strides = array<i32>} : memref<16x32xf32, #tpu.memory_space<vmem>>, vector<16x32xf32>,
    return
  }
  func.func @transform_0(%arg0: i32) -> (i32, i32) {
    %c0_i32 = arith.constant 0 : i32
    %c0_i32_0 = arith.constant 0 : i32
    return %arg0, %c0_i32 : i32, i32
  }
  func.func @transform_1(%arg0: i32) -> (i32, i32) {
    %c0_i32 = arith.constant 0 : i32
    %c0_i32_0 = arith.constant 0 : i32
    return %arg0, %c0_i32 : i32, i32
  }
  func.func @transform_2(%arg0: i32) -> (i32, i32) {
    %c0_i32 = arith.constant 0 : i32
    %c0_i32_0 = arith.constant 0 : i32
    %c0_i32_1 = arith.constant 0 : i32
    return %c0_i32, %c0_i32_0 : i32, i32
  }
  func.func @transform_3(%arg0: i32) -> (i32, i32) {
    %c0_i32 = arith.constant 0 : i32
    %c0_i32_0 = arith.constant 0 : i32
    %c0_i32_1 = arith.constant 0 : i32
    return %c0_i32, %c0_i32_0 : i32, i32
  }
  func.func @transform_4(%arg0: i32) -> (i32, i32) {
    %c0_i32 = arith.constant 0 : i32
    %c0_i32_0 = arith.constant 0 : i32
    return %arg0, %c0_i32 : i32, i32
  }
}

</mosaic_0001>

<llo_original>
// kernel: transformer_encoder_forward.15
$region0: #{transformer_encoder_forward.15}
  #allocation0 [shape = 'u32[]', space=smem, size = 0x4, offset = 0x4, fixed_abs, tag = 'smem constant byte address 0x4 - core index']
  #allocation1 [shape = 'u32[144,128]{1,0:T(1,128)}', space=vmem, size = 0x12000, scoped, tag = 'internal scratch']
  #allocation2 [shape = 'f32[16,32]{1,0:T(8,128)}', space=vmem, size = 0x2000, scoped, tag = 'scratch operand']
  %s0 = inlined_call_operand.hbm [shape: f32[16,32], index: 0, kind: input, shape index: {}]
  %s1 = inlined_call_operand.hbm [shape: f32[32,32], index: 1, kind: input, shape index: {}]
  %s2 = inlined_call_operand.vmem [shape: f32[1,32], index: 2, kind: input, shape index: {}]
  %s3 = inlined_call_operand.vmem [shape: f32[16,32], index: 3, kind: output, shape index: {}]
  %s4 = sld [smem:[#allocation0]]
  $region38: #{transformer_encoder_forward.15} parent=0
    _
  %s6 = ssub.s32 1, %s4
  %s7 = scalar_select 0, %s6, %s4
  $region1: #{transformer_encoder_forward.15} parent=0
    #allocation3 [shape = 'u8[8192]{0}', space=vmem, size = 0x2000, scoped, tag = 'input window, operand 0, single buffered']
    #allocation4 [shape = 's32[1]{0}', space=sflag, size = 0x4, scoped, tag = 'scoped memory for transformer_encoder_forward.15']
    #allocation5 [shape = 'u8[16384]{0}', space=vmem, size = 0x4000, scoped, tag = 'input window, operand 1, single buffered']
    #allocation6 [shape = 's32[1]{0}', space=sflag, size = 0x4, scoped, tag = 'scoped memory for transformer_encoder_forward.15']
    %8 = vsyncpa [#allocation4], 0
    %9 = vsyncpa [#allocation6], 0
    // Predicated region
    $region2: #{transformer_encoder_forward.15} parent=1 // pred_check
      _
    $region3: #{transformer_encoder_forward.15} parent=1 // pred_check_branch
      %11 = sbr.rel (0) target = $region5
    $region4: #{transformer_encoder_forward.15} parent=1 // pred_region
      %s13 = ssub.s32 256, 256
      %14 = vsyncadd [#allocation4], %s13
      %s15 = sshll.u32 [#allocation3], 4
      %s16 = int_to_ptr.vmem [resolvable:$true] %s15
      %21 = dma.hbm_to_vmem [thread:$0]  %s0, 256, %s16, [#allocation4], 128, 128, 8
    $region5: #{transformer_encoder_forward.15} parent=1 // pred_fallthru
      _
    // Predicated region
    $region6: #{transformer_encoder_forward.15} parent=1 // pred_check
      _
    $region7: #{transformer_encoder_forward.15} parent=1 // pred_check_branch
      %23 = sbr.rel (0) target = $region9
    $region8: #{transformer_encoder_forward.15} parent=1 // pred_region
      %s25 = ssub.s32 512, 512
      %26 = vsyncadd [#allocation6], %s25
      %s27 = sshll.u32 [#allocation5], 4
      %s28 = int_to_ptr.vmem [resolvable:$true] %s27
      %33 = dma.hbm_to_vmem [thread:$0]  %s1, 512, %s28, [#allocation6], 128, 128, 8
    $region9: #{transformer_encoder_forward.15} parent=1 // pred_fallthru
      _
    // Predicated region
    $region10: #{transformer_encoder_forward.15} parent=1 // pred_check
      _
    $region11: #{transformer_encoder_forward.15} parent=1 // pred_check_branch
      %35 = sbr.rel (0) target = $region13
    $region12: #{transformer_encoder_forward.15} parent=1 // pred_region
      _
    $region13: #{transformer_encoder_forward.15} parent=1 // pred_fallthru
      _
    // Predicated region
    $region14: #{transformer_encoder_forward.15} parent=1 // pred_check
      _
    $region15: #{transformer_encoder_forward.15} parent=1 // pred_check_branch
      %37 = sbr.rel (0) target = $region17
    $region16: #{transformer_encoder_forward.15} parent=1 // pred_region
      %38 = dma.done [#allocation4], 256
    $region17: #{transformer_encoder_forward.15} parent=1 // pred_fallthru
      _
    // Predicated region
    $region18: #{transformer_encoder_forward.15} parent=1 // pred_check
      _
    $region19: #{transformer_encoder_forward.15} parent=1 // pred_check_branch
      %40 = sbr.rel (0) target = $region21
    $region20: #{transformer_encoder_forward.15} parent=1 // pred_region
      %41 = dma.done [#allocation6], 512
    $region21: #{transformer_encoder_forward.15} parent=1 // pred_fallthru
      _
    %p42 = scmp.eq.s32.totalorder 0, 0
    // Predicated region
    $region22: #{transformer_encoder_forward.15} parent=1 // pred_check
      %p43 = pneg %p42
    $region23: #{transformer_encoder_forward.15} parent=1 // pred_check_branch
      %45 = sbr.rel (%p43) target = $region25
    $region24: #{transformer_encoder_forward.15} parent=1 // pred_region
      %vm46 = vcmask 261120
      %47 = vst.msk [vmem:[#allocation2] sm:$0xff] %vm46, 0.0
      %48 = vst.msk [vmem:[#allocation2 + $0x8] sm:$0xff] %vm46, 0.0
    $region25: #{transformer_encoder_forward.15} parent=1 // pred_fallthru
      _
    %v49 = vld [vmem:[#allocation2] sm:$0xff]
    %v50 = vld [vmem:[#allocation2 + $0x8] sm:$0xff]
    %v51 = vld [vmem:[#allocation3] sm:$0xff]
    %v52 = vld [vmem:[#allocation3 + $0x8] sm:$0xff]
    %v53 = vld [vmem:[#allocation5] sm:$0xff]
    %v54 = vld [vmem:[#allocation5 + $0x8] sm:$0xff]
    %v55 = vld [vmem:[#allocation5 + $0x10] sm:$0xff]
    %v56 = vld [vmem:[#allocation5 + $0x18] sm:$0xff]
    %vm57 = vcmask 261120
    %v59 = vsel %vm57, %v51, 0
    %v62 = vsel %vm57, %v52, 0
    %64 = vmatprep.subr.mxu0 0.0
    %65 = vmatpush1.msra.mxu0 0.0
    %66 = vmatprep.subr.mxu0 0.0
    %67 = vmatpush1.msra.mxu0 0.0
    %68 = vmatprep.subr.mxu0 0.0
    %69 = vmatpush1.msra.mxu0 0.0
    %70 = vmatprep.subr.mxu0 0.0
    %71 = vmatpush1.msra.mxu0 0.0
    %72 = vmatprep.subr.mxu0 0.0
    %73 = vmatpush1.msra.mxu0 0.0
    %74 = vmatprep.subr.mxu0 0.0
    %75 = vmatpush1.msra.mxu0 0.0
    %76 = vmatprep.subr.mxu0 0.0
    %77 = vmatpush1.msra.mxu0 0.0
    %78 = vmatprep.subr.mxu0 0.0
    %79 = vmatpush1.msra.mxu0 0.0
    %80 = vmatprep.subr.mxu0 0.0
    %81 = vmatpush1.msra.mxu0 0.0
    %82 = vmatprep.subr.mxu0 0.0
    %83 = vmatpush1.msra.mxu0 0.0
    %84 = vmatprep.subr.mxu0 0.0
    %85 = vmatpush1.msra.mxu0 0.0
    %86 = vmatprep.subr.mxu0 0.0
    %87 = vmatpush1.msra.mxu0 0.0
    %88 = vmatprep.subr.mxu0 0.0
    %89 = vmatpush1.msra.mxu0 %v56
    %90 = vmatprep.subr.mxu0 0.0
    %91 = vmatpush1.msra.mxu0 %v55
    %92 = vmatprep.subr.mxu0 0.0
    %93 = vmatpush1.msra.mxu0 %v54
    %94 = vmatprep.subr.mxu0 0.0
    %95 = vmatpush1.msra.mxu0 %v53
    %96 = vmatprep.subr.mxu0 0.0
    %97 = vmatpush2.msra.mxu0 0.0
    %98 = vmatprep.subr.mxu0 0.0
    %99 = vmatpush2.msra.mxu0 0.0
    %100 = vmatprep.subr.mxu0 0.0
    %101 = vmatpush2.msra.mxu0 0.0
    %102 = vmatprep.subr.mxu0 0.0
    %103 = vmatpush2.msra.mxu0 0.0
    %104 = vmatprep.subr.mxu0 0.0
    %105 = vmatpush2.msra.mxu0 0.0
    %106 = vmatprep.subr.mxu0 0.0
    %107 = vmatpush2.msra.mxu0 0.0
    %108 = vmatprep.subr.mxu0 0.0
    %109 = vmatpush2.msra.mxu0 0.0
    %110 = vmatprep.subr.mxu0 0.0
    %111 = vmatpush2.msra.mxu0 0.0
    %112 = vmatprep.subr.mxu0 0.0
    %113 = vmatpush2.msra.mxu0 0.0
    %114 = vmatprep.subr.mxu0 0.0
    %115 = vmatpush2.msra.mxu0 0.0
    %116 = vmatprep.subr.mxu0 0.0
    %117 = vmatpush2.msra.mxu0 0.0
    %118 = vmatprep.subr.mxu0 0.0
    %119 = vmatpush2.msra.mxu0 0.0
    %120 = vmatprep.subr.mxu0 0.0
    %121 = vmatpush2.msra.mxu0 0.0
    %122 = vmatprep.subr.mxu0 0.0
    %123 = vmatpush2.msra.mxu0 0.0
    %124 = vmatprep.subr.mxu0 0.0
    %125 = vmatpush2.msra.mxu0 0.0
    %126 = vmatprep.subr.mxu0 0.0
    %127 = vmatpush2.msra.mxu0 0.0
    %128 = vmatprep.mubr.f32.mxu0 0.0
    %129 = vmatmul.mubr.f32.gmra.mxu0 %v59
    %v130 = vpop.f32.mrf.mxu0
    %v131 = vadd.f32 0.0, %v130
    %v132 = vpop.f32.mrf.mxu0
    %133 = vmatprep.mubr.f32.mxu0 0.0
    %134 = vmatmul.mubr.f32.gmra.mxu0 %v62
    %v135 = vpop.f32.mrf.mxu0
    %v136 = vadd.f32 0.0, %v135
    %v137 = vpop.f32.mrf.mxu0
    %138 = vdwg.mxu0
    %v139 = vadd.f32 %v49, %v131
    %v140 = vadd.f32 %v50, %v136
    %141 = vst.msk [vmem:[#allocation2] sm:$0xff] %vm57, %v139
    %142 = vst.msk [vmem:[#allocation2 + $0x8] sm:$0xff] %vm57, %v140
    // Predicated region
    $region26: #{transformer_encoder_forward.15} parent=1 // pred_check
      %p143 = pneg %p42
    $region27: #{transformer_encoder_forward.15} parent=1 // pred_check_branch
      %145 = sbr.rel (%p143) target = $region29
    $region28: #{transformer_encoder_forward.15} parent=1 // pred_region
      %v146 = vld [vmem:[#allocation2] sm:$0xff]
      %v147 = vld [vmem:[#allocation2 + $0x8] sm:$0xff]
      %v148 = vld [vmem:[%s2] sm:$0x1]
      %v150 = vlaneseq
      %v151 = vshrl.u32 %v150, 7
      %v152 = vsub.s32 0, %v151
      %v153 = vrot.slane %v148, %v152
      %v155 = vadd.f32 %v146, %v153
      %v156 = vadd.f32 %v147, %v153
      %157 = vst.msk [vmem:[%s3] sm:$0xff] %vm57, %v155
      %158 = vst.msk [vmem:[%s3 + $0x8] sm:$0xff] %vm57, %v156
    $region29: #{transformer_encoder_forward.15} parent=1 // pred_fallthru
      _
    // Predicated region
    $region30: #{transformer_encoder_forward.15} parent=1 // pred_check
      _
    $region31: #{transformer_encoder_forward.15} parent=1 // pred_check_branch
      %160 = sbr.rel (0) target = $region33
    $region32: #{transformer_encoder_forward.15} parent=1 // pred_region
      _
    $region33: #{transformer_encoder_forward.15} parent=1 // pred_fallthru
      _
    // Predicated region
    $region34: #{transformer_encoder_forward.15} parent=1 // pred_check
      _
    $region35: #{transformer_encoder_forward.15} parent=1 // pred_check_branch
      %162 = sbr.rel (0) target = $region37
    $region36: #{transformer_encoder_forward.15} parent=1 // pred_region
      _
    $region37: #{transformer_encoder_forward.15} parent=1 // pred_fallthru
      _
    %163 = vsyncpa [#allocation4], 1
    %164 = vsyncpa [#allocation6], 1

// kernel: transformer_encoder_forward.16
$region0: #{transformer_encoder_forward.16}
  #allocation0 [shape = 'u32[]', space=smem, size = 0x4, offset = 0x4, fixed_abs, tag = 'smem constant byte address 0x4 - core index']
  #allocation1 [shape = 'u32[144,128]{1,0:T(1,128)}', space=vmem, size = 0x12000, scoped, tag = 'internal scratch']
  #allocation2 [shape = 'f32[16,96]{1,0:T(8,128)}', space=vmem, size = 0x2000, scoped, tag = 'scratch operand']
  %s0 = inlined_call_operand.vmem [shape: f32[16,32], index: 0, kind: input, shape index: {}]
  %s1 = inlined_call_operand.vmem [shape: f32[32,96], index: 1, kind: input, shape index: {}]
  %s2 = inlined_call_operand.vmem [shape: f32[1,96], index: 2, kind: input, shape index: {}]
  %s3 = inlined_call_operand.vmem [shape: f32[16,96], index: 3, kind: output, shape index: {}]
  %s4 = sld [smem:[#allocation0]]
  $region30: #{transformer_encoder_forward.16} parent=0
    _
  %s6 = ssub.s32 1, %s4
  %s7 = scalar_select 0, %s6, %s4
  // Predicated region
  $region2: #{transformer_encoder_forward.16} parent=0 // pred_check
    _
  $region3: #{transformer_encoder_forward.16} parent=0 // pred_check_branch
    %9 = sbr.rel (0) target = $region5
  $region4: #{transformer_encoder_forward.16} parent=0 // pred_region
    _
  $region5: #{transformer_encoder_forward.16} parent=0 // pred_fallthru
    _
  // Predicated region
  $region6: #{transformer_encoder_forward.16} parent=0 // pred_check
    _
  $region7: #{transformer_encoder_forward.16} parent=0 // pred_check_branch
    %11 = sbr.rel (0) target = $region9
  $region8: #{transformer_encoder_forward.16} parent=0 // pred_region
    _
  $region9: #{transformer_encoder_forward.16} parent=0 // pred_fallthru
    _
  // Predicated region
  $region10: #{transformer_encoder_forward.16} parent=0 // pred_check
    _
  $region11: #{transformer_encoder_forward.16} parent=0 // pred_check_branch
    %13 = sbr.rel (0) target = $region13
  $region12: #{transformer_encoder_forward.16} parent=0 // pred_region
    _
  $region13: #{transformer_encoder_forward.16} parent=0 // pred_fallthru
    _
  %p14 = scmp.eq.s32.totalorder 0, 0
  // Predicated region
  $region14: #{transformer_encoder_forward.16} parent=0 // pred_check
    %p15 = pneg %p14
  $region15: #{transformer_encoder_forward.16} parent=0 // pred_check_branch
    %17 = sbr.rel (%p15) target = $region17
  $region16: #{transformer_encoder_forward.16} parent=0 // pred_region
    %vm18 = vcmask 785408
    %19 = vst.msk [vmem:[#allocation2] sm:$0xff] %vm18, 0.0
    %20 = vst.msk [vmem:[#allocation2 + $0x8] sm:$0xff] %vm18, 0.0
  $region17: #{transformer_encoder_forward.16} parent=0 // pred_fallthru
    _
  %v21 = vld [vmem:[#allocation2] sm:$0xff]
  %v22 = vld [vmem:[#allocation2 + $0x8] sm:$0xff]
  %v23 = vld [vmem:[%s0] sm:$0xff]
  %v24 = vld [vmem:[%s0 + $0x8] sm:$0xff]
  %v25 = vld [vmem:[%s1] sm:$0xff]
  %v26 = vld [vmem:[%s1 + $0x8] sm:$0xff]
  %v27 = vld [vmem:[%s1 + $0x10] sm:$0xff]
  %v28 = vld [vmem:[%s1 + $0x18] sm:$0xff]
  %vm29 = vcmask 261120
  %v31 = vsel %vm29, %v23, 0
  %v34 = vsel %vm29, %v24, 0
  %36 = vmatprep.subr.mxu0 0.0
  %37 = vmatpush1.msra.mxu0 0.0
  %38 = vmatprep.subr.mxu0 0.0
  %39 = vmatpush1.msra.mxu0 0.0
  %40 = vmatprep.subr.mxu0 0.0
  %41 = vmatpush1.msra.mxu0 0.0
  %42 = vmatprep.subr.mxu0 0.0
  %43 = vmatpush1.msra.mxu0 0.0
  %44 = vmatprep.subr.mxu0 0.0
  %45 = vmatpush1.msra.mxu0 0.0
  %46 = vmatprep.subr.mxu0 0.0
  %47 = vmatpush1.msra.mxu0 0.0
  %48 = vmatprep.subr.mxu0 0.0
  %49 = vmatpush1.msra.mxu0 0.0
  %50 = vmatprep.subr.mxu0 0.0
  %51 = vmatpush1.msra.mxu0 0.0
  %52 = vmatprep.subr.mxu0 0.0
  %53 = vmatpush1.msra.mxu0 0.0
  %54 = vmatprep.subr.mxu0 0.0
  %55 = vmatpush1.msra.mxu0 0.0
  %56 = vmatprep.subr.mxu0 0.0
  %57 = vmatpush1.msra.mxu0 0.0
  %58 = vmatprep.subr.mxu0 0.0
  %59 = vmatpush1.msra.mxu0 0.0
  %60 = vmatprep.subr.mxu0 0.0
  %61 = vmatpush1.msra.mxu0 %v28
  %62 = vmatprep.subr.mxu0 0.0
  %63 = vmatpush1.msra.mxu0 %v27
  %64 = vmatprep.subr.mxu0 0.0
  %65 = vmatpush1.msra.mxu0 %v26
  %66 = vmatprep.subr.mxu0 0.0
  %67 = vmatpush1.msra.mxu0 %v25
  %68 = vmatprep.subr.mxu0 0.0
  %69 = vmatpush2.msra.mxu0 0.0
  %70 = vmatprep.subr.mxu0 0.0
  %71 = vmatpush2.msra.mxu0 0.0
  %72 = vmatprep.subr.mxu0 0.0
  %73 = vmatpush2.msra.mxu0 0.0
  %74 = vmatprep.subr.mxu0 0.0
  %75 = vmatpush2.msra.mxu0 0.0
  %76 = vmatprep.subr.mxu0 0.0
  %77 = vmatpush2.msra.mxu0 0.0
  %78 = vmatprep.subr.mxu0 0.0
  %79 = vmatpush2.msra.mxu0 0.0
  %80 = vmatprep.subr.mxu0 0.0
  %81 = vmatpush2.msra.mxu0 0.0
  %82 = vmatprep.subr.mxu0 0.0
  %83 = vmatpush2.msra.mxu0 0.0
  %84 = vmatprep.subr.mxu0 0.0
  %85 = vmatpush2.msra.mxu0 0.0
  %86 = vmatprep.subr.mxu0 0.0
  %87 = vmatpush2.msra.mxu0 0.0
  %88 = vmatprep.subr.mxu0 0.0
  %89 = vmatpush2.msra.mxu0 0.0
  %90 = vmatprep.subr.mxu0 0.0
  %91 = vmatpush2.msra.mxu0 0.0
  %92 = vmatprep.subr.mxu0 0.0
  %93 = vmatpush2.msra.mxu0 0.0
  %94 = vmatprep.subr.mxu0 0.0
  %95 = vmatpush2.msra.mxu0 0.0
  %96 = vmatprep.subr.mxu0 0.0
  %97 = vmatpush2.msra.mxu0 0.0
  %98 = vmatprep.subr.mxu0 0.0
  %99 = vmatpush2.msra.mxu0 0.0
  %100 = vmatprep.mubr.f32.mxu0 0.0
  %101 = vmatmul.mubr.f32.gmra.mxu0 %v31
  %v102 = vpop.f32.mrf.mxu0
  %v103 = vadd.f32 0.0, %v102
  %v104 = vpop.f32.mrf.mxu0
  %105 = vmatprep.mubr.f32.mxu0 0.0
  %106 = vmatmul.mubr.f32.gmra.mxu0 %v34
  %v107 = vpop.f32.mrf.mxu0
  %v108 = vadd.f32 0.0, %v107
  %v109 = vpop.f32.mrf.mxu0
  %110 = vdwg.mxu0
  %v111 = vadd.f32 %v21, %v103
  %v112 = vadd.f32 %v22, %v108
  %vm113 = vcmask 785408
  %114 = vst.msk [vmem:[#allocation2] sm:$0xff] %vm113, %v111
  %115 = vst.msk [vmem:[#allocation2 + $0x8] sm:$0xff] %vm113, %v112
  // Predicated region
  $region18: #{transformer_encoder_forward.16} parent=0 // pred_check
    %p116 = pneg %p14
  $region19: #{transformer_encoder_forward.16} parent=0 // pred_check_branch
    %118 = sbr.rel (%p116) target = $region21
  $region20: #{transformer_encoder_forward.16} parent=0 // pred_region
    %v119 = vld [vmem:[#allocation2] sm:$0xff]
    %v120 = vld [vmem:[#allocation2 + $0x8] sm:$0xff]
    %v121 = vld [vmem:[%s2] sm:$0x1]
    %v123 = vlaneseq
    %v124 = vshrl.u32 %v123, 7
    %v125 = vsub.s32 0, %v124
    %v126 = vrot.slane %v121, %v125
    %v128 = vadd.f32 %v119, %v126
    %v129 = vadd.f32 %v120, %v126
    %130 = vst.msk [vmem:[%s3] sm:$0xff] %vm113, %v128
    %131 = vst.msk [vmem:[%s3 + $0x8] sm:$0xff] %vm113, %v129
  $region21: #{transformer_encoder_forward.16} parent=0 // pred_fallthru
    _
  // Predicated region
  $region22: #{transformer_encoder_forward.16} parent=0 // pred_check
    _
  $region23: #{transformer_encoder_forward.16} parent=0 // pred_check_branch
    %133 = sbr.rel (0) target = $region25
  $region24: #{transformer_encoder_forward.16} parent=0 // pred_region
    _
  $region25: #{transformer_encoder_forward.16} parent=0 // pred_fallthru
    _
  // Predicated region
  $region26: #{transformer_encoder_forward.16} parent=0 // pred_check
    _
  $region27: #{transformer_encoder_forward.16} parent=0 // pred_check_branch
    %135 = sbr.rel (0) target = $region29
  $region28: #{transformer_encoder_forward.16} parent=0 // pred_region
    _
  $region29: #{transformer_encoder_forward.16} parent=0 // pred_fallthru
    _

// kernel: transformer_encoder_forward.18
$region0: #{transformer_encoder_forward.18}
  #allocation0 [shape = 'u32[]', space=smem, size = 0x4, offset = 0x4, fixed_abs, tag = 'smem constant byte address 0x4 - core index']
  #allocation1 [shape = 'u32[144,128]{1,0:T(1,128)}', space=vmem, size = 0x12000, scoped, tag = 'internal scratch']
  #allocation2 [shape = 'f32[16,32]{1,0:T(8,128)}', space=vmem, size = 0x2000, scoped, tag = 'scratch operand']
  %s0 = inlined_call_operand.vmem [shape: f32[16,32], index: 0, kind: input, shape index: {}]
  %s1 = inlined_call_operand.vmem [shape: f32[32,32], index: 1, kind: input, shape index: {}]
  %s2 = inlined_call_operand.vmem [shape: f32[1,32], index: 2, kind: input, shape index: {}]
  %s3 = inlined_call_operand.vmem [shape: f32[16,32], index: 3, kind: output, shape index: {}]
  %s4 = sld [smem:[#allocation0]]
  $region30: #{transformer_encoder_forward.18} parent=0
    _
  %s6 = ssub.s32 1, %s4
  %s7 = scalar_select 0, %s6, %s4
  // Predicated region
  $region2: #{transformer_encoder_forward.18} parent=0 // pred_check
    _
  $region3: #{transformer_encoder_forward.18} parent=0 // pred_check_branch
    %9 = sbr.rel (0) target = $region5
  $region4: #{transformer_encoder_forward.18} parent=0 // pred_region
    _
  $region5: #{transformer_encoder_forward.18} parent=0 // pred_fallthru
    _
  // Predicated region
  $region6: #{transformer_encoder_forward.18} parent=0 // pred_check
    _
  $region7: #{transformer_encoder_forward.18} parent=0 // pred_check_branch
    %11 = sbr.rel (0) target = $region9
  $region8: #{transformer_encoder_forward.18} parent=0 // pred_region
    _
  $region9: #{transformer_encoder_forward.18} parent=0 // pred_fallthru
    _
  // Predicated region
  $region10: #{transformer_encoder_forward.18} parent=0 // pred_check
    _
  $region11: #{transformer_encoder_forward.18} parent=0 // pred_check_branch
    %13 = sbr.rel (0) target = $region13
  $region12: #{transformer_encoder_forward.18} parent=0 // pred_region
    _
  $region13: #{transformer_encoder_forward.18} parent=0 // pred_fallthru
    _
  %p14 = scmp.eq.s32.totalorder 0, 0
  // Predicated region
  $region14: #{transformer_encoder_forward.18} parent=0 // pred_check
    %p15 = pneg %p14
  $region15: #{transformer_encoder_forward.18} parent=0 // pred_check_branch
    %17 = sbr.rel (%p15) target = $region17
  $region16: #{transformer_encoder_forward.18} parent=0 // pred_region
    %vm18 = vcmask 261120
    %19 = vst.msk [vmem:[#allocation2] sm:$0xff] %vm18, 0.0
    %20 = vst.msk [vmem:[#allocation2 + $0x8] sm:$0xff] %vm18, 0.0
  $region17: #{transformer_encoder_forward.18} parent=0 // pred_fallthru
    _
  %v21 = vld [vmem:[#allocation2] sm:$0xff]
  %v22 = vld [vmem:[#allocation2 + $0x8] sm:$0xff]
  %v23 = vld [vmem:[%s0] sm:$0xff]
  %v24 = vld [vmem:[%s0 + $0x8] sm:$0xff]
  %v25 = vld [vmem:[%s1] sm:$0xff]
  %v26 = vld [vmem:[%s1 + $0x8] sm:$0xff]
  %v27 = vld [vmem:[%s1 + $0x10] sm:$0xff]
  %v28 = vld [vmem:[%s1 + $0x18] sm:$0xff]
  %vm29 = vcmask 261120
  %v31 = vsel %vm29, %v23, 0
  %v34 = vsel %vm29, %v24, 0
  %36 = vmatprep.subr.mxu0 0.0
  %37 = vmatpush1.msra.mxu0 0.0
  %38 = vmatprep.subr.mxu0 0.0
  %39 = vmatpush1.msra.mxu0 0.0
  %40 = vmatprep.subr.mxu0 0.0
  %41 = vmatpush1.msra.mxu0 0.0
  %42 = vmatprep.subr.mxu0 0.0
  %43 = vmatpush1.msra.mxu0 0.0
  %44 = vmatprep.subr.mxu0 0.0
  %45 = vmatpush1.msra.mxu0 0.0
  %46 = vmatprep.subr.mxu0 0.0
  %47 = vmatpush1.msra.mxu0 0.0
  %48 = vmatprep.subr.mxu0 0.0
  %49 = vmatpush1.msra.mxu0 0.0
  %50 = vmatprep.subr.mxu0 0.0
  %51 = vmatpush1.msra.mxu0 0.0
  %52 = vmatprep.subr.mxu0 0.0
  %53 = vmatpush1.msra.mxu0 0.0
  %54 = vmatprep.subr.mxu0 0.0
  %55 = vmatpush1.msra.mxu0 0.0
  %56 = vmatprep.subr.mxu0 0.0
  %57 = vmatpush1.msra.mxu0 0.0
  %58 = vmatprep.subr.mxu0 0.0
  %59 = vmatpush1.msra.mxu0 0.0
  %60 = vmatprep.subr.mxu0 0.0
  %61 = vmatpush1.msra.mxu0 %v28
  %62 = vmatprep.subr.mxu0 0.0
  %63 = vmatpush1.msra.mxu0 %v27
  %64 = vmatprep.subr.mxu0 0.0
  %65 = vmatpush1.msra.mxu0 %v26
  %66 = vmatprep.subr.mxu0 0.0
  %67 = vmatpush1.msra.mxu0 %v25
  %68 = vmatprep.subr.mxu0 0.0
  %69 = vmatpush2.msra.mxu0 0.0
  %70 = vmatprep.subr.mxu0 0.0
  %71 = vmatpush2.msra.mxu0 0.0
  %72 = vmatprep.subr.mxu0 0.0
  %73 = vmatpush2.msra.mxu0 0.0
  %74 = vmatprep.subr.mxu0 0.0
  %75 = vmatpush2.msra.mxu0 0.0
  %76 = vmatprep.subr.mxu0 0.0
  %77 = vmatpush2.msra.mxu0 0.0
  %78 = vmatprep.subr.mxu0 0.0
  %79 = vmatpush2.msra.mxu0 0.0
  %80 = vmatprep.subr.mxu0 0.0
  %81 = vmatpush2.msra.mxu0 0.0
  %82 = vmatprep.subr.mxu0 0.0
  %83 = vmatpush2.msra.mxu0 0.0
  %84 = vmatprep.subr.mxu0 0.0
  %85 = vmatpush2.msra.mxu0 0.0
  %86 = vmatprep.subr.mxu0 0.0
  %87 = vmatpush2.msra.mxu0 0.0
  %88 = vmatprep.subr.mxu0 0.0
  %89 = vmatpush2.msra.mxu0 0.0
  %90 = vmatprep.subr.mxu0 0.0
  %91 = vmatpush2.msra.mxu0 0.0
  %92 = vmatprep.subr.mxu0 0.0
  %93 = vmatpush2.msra.mxu0 0.0
  %94 = vmatprep.subr.mxu0 0.0
  %95 = vmatpush2.msra.mxu0 0.0
  %96 = vmatprep.subr.mxu0 0.0
  %97 = vmatpush2.msra.mxu0 0.0
  %98 = vmatprep.subr.mxu0 0.0
  %99 = vmatpush2.msra.mxu0 0.0
  %100 = vmatprep.mubr.f32.mxu0 0.0
  %101 = vmatmul.mubr.f32.gmra.mxu0 %v31
  %v102 = vpop.f32.mrf.mxu0
  %v103 = vadd.f32 0.0, %v102
  %v104 = vpop.f32.mrf.mxu0
  %105 = vmatprep.mubr.f32.mxu0 0.0
  %106 = vmatmul.mubr.f32.gmra.mxu0 %v34
  %v107 = vpop.f32.mrf.mxu0
  %v108 = vadd.f32 0.0, %v107
  %v109 = vpop.f32.mrf.mxu0
  %110 = vdwg.mxu0
  %v111 = vadd.f32 %v21, %v103
  %v112 = vadd.f32 %v22, %v108
  %113 = vst.msk [vmem:[#allocation2] sm:$0xff] %vm29, %v111
  %114 = vst.msk [vmem:[#allocation2 + $0x8] sm:$0xff] %vm29, %v112
  // Predicated region
  $region18: #{transformer_encoder_forward.18} parent=0 // pred_check
    %p115 = pneg %p14
  $region19: #{transformer_encoder_forward.18} parent=0 // pred_check_branch
    %117 = sbr.rel (%p115) target = $region21
  $region20: #{transformer_encoder_forward.18} parent=0 // pred_region
    %v118 = vld [vmem:[#allocation2] sm:$0xff]
    %v119 = vld [vmem:[#allocation2 + $0x8] sm:$0xff]
    %v120 = vld [vmem:[%s2] sm:$0x1]
    %v122 = vlaneseq
    %v123 = vshrl.u32 %v122, 7
    %v124 = vsub.s32 0, %v123
    %v125 = vrot.slane %v120, %v124
    %v127 = vadd.f32 %v118, %v125
    %v128 = vadd.f32 %v119, %v125
    %129 = vst.msk [vmem:[%s3] sm:$0xff] %vm29, %v127
    %130 = vst.msk [vmem:[%s3 + $0x8] sm:$0xff] %vm29, %v128
  $region21: #{transformer_encoder_forward.18} parent=0 // pred_fallthru
    _
  // Predicated region
  $region22: #{transformer_encoder_forward.18} parent=0 // pred_check
    _
  $region23: #{transformer_encoder_forward.18} parent=0 // pred_check_branch
    %132 = sbr.rel (0) target = $region25
  $region24: #{transformer_encoder_forward.18} parent=0 // pred_region
    _
  $region25: #{transformer_encoder_forward.18} parent=0 // pred_fallthru
    _
  // Predicated region
  $region26: #{transformer_encoder_forward.18} parent=0 // pred_check
    _
  $region27: #{transformer_encoder_forward.18} parent=0 // pred_check_branch
    %134 = sbr.rel (0) target = $region29
  $region28: #{transformer_encoder_forward.18} parent=0 // pred_region
    _
  $region29: #{transformer_encoder_forward.18} parent=0 // pred_fallthru
    _

// kernel: transformer_encoder_forward.17
$region0: #{transformer_encoder_forward.17}
  #allocation0 [shape = 'u32[]', space=smem, size = 0x4, offset = 0x4, fixed_abs, tag = 'smem constant byte address 0x4 - core index']
  #allocation1 [shape = 'u32[144,128]{1,0:T(1,128)}', space=vmem, size = 0x12000, scoped, tag = 'internal scratch']
  %s0 = inlined_call_operand.vmem [shape: f32[2,4,8,8], index: 0, kind: input, shape index: {}]
  %s1 = inlined_call_operand.vmem [shape: f32[2,4,8,8], index: 1, kind: input, shape index: {}]
  %s2 = inlined_call_operand.vmem [shape: f32[2,4,8,8], index: 2, kind: input, shape index: {}]
  %s3 = inlined_call_operand.vmem [shape: f32[2,4,8,8], index: 3, kind: output, shape index: {}]
  %s4 = sld [smem:[#allocation0]]
  $region45: #{transformer_encoder_forward.17} parent=0
    _
  %s6 = ssub.s32 1, %s4
  %s7 = scalar_select 0, %s6, %s4
  loop: start=0, step=1, limit=10
  $region2: #{transformer_encoder_forward.17} parent=0 // loop_pre_header
    _
  $region3: #{transformer_encoder_forward.17} parent=0 // loop_header
    %s9 = sphi 0, %s13
    %p10 = scmp.ge.s32.totalorder %s9, 10
    %s16 = sphi 0, %s28
    %s17 = sphi 0, %s24
    %s18 = sphi 0, %s16
    %s19 = sphi 0, %s17
    %s20 = sphi 0, %s18
    %s21 = sphi 0, %s19
    %s33 = sphi 0, %s35
    %s36 = sphi 0, %s33
    %s37 = sphi 0, %s36
    %s53 = sphi 0, %s37
    %s61 = sphi 0, %s63
    %s64 = sphi 0, %s61
    %s65 = sphi 0, %s64
    %s81 = sphi 0, %s65
    %s89 = sphi 0, %s91
    %s92 = sphi 0, %s89
    %s93 = sphi 0, %s92
    %s109 = sphi 0, %s93
    %s117 = sphi 0, %s119
    %s120 = sphi 0, %s117
    %s121 = sphi 0, %s120
    %s137 = sphi 0, %s121
  $region4: #{transformer_encoder_forward.17} parent=0 // loop_header_branch
    %12 = sbr.rel (%p10) target = $region8
  $region5: #{transformer_encoder_forward.17} parent=0 // loop_body
    %s14 = ssub.s32 %s9, 1
    %s15 = ssub.s32 %s9, 2
    %s22 = sadd.s32 1, %s17
    %p23 = scmp.ge.s32.totalorder %s22, 4
    %s24 = scalar_select %p23, 0, %s22
    %s25 = sadd.s32 1, %s16
    %s26 = scalar_select %p23, %s25, %s16
    %p27 = scmp.ge.s32.totalorder %s26, 2
    %s28 = scalar_select %p27, 0, %s26
    %s29 = ssub.s32 %s16, %s28
    %s30 = ssub.s32 %s17, %s24
    %s31 = sor.u32 %s29, %s30
    %p32 = scmp.eq.s32.totalorder %s31, 0
    %s34 = sadd.s32 %s33, 1
    %s35 = scalar_select %p32, %s33, %s34
    %p38 = pneg %p32
    %p39 = scmp.eq.s32.totalorder %s9, 7
    %p40 = por %p38, %p39
    %p41 = scmp.ne.s32.totalorder %s33, %s36
    %p42 = scmp.eq.s32.totalorder %s9, 0
    %p43 = por %p41, %p42
    %p44 = scmp.ne.s32.totalorder %s33, %s36
    %p45 = scmp.eq.s32.totalorder %s14, 7
    %p46 = por %p44, %p45
    %p47 = scmp.ne.s32.totalorder %s36, %s37
    %p48 = scmp.eq.s32.totalorder %s14, 0
    %p49 = por %p47, %p48
    %p50 = scmp.ne.s32.totalorder %s36, %s37
    %p51 = scmp.eq.s32.totalorder %s15, 7
    %p52 = por %p50, %p51
    %p54 = scmp.ne.s32.totalorder %s37, %s53
    %p55 = scmp.eq.s32.totalorder %s15, 0
    %p56 = por %p54, %p55
    %s57 = ssub.s32 %s16, %s28
    %s58 = ssub.s32 %s17, %s24
    %s59 = sor.u32 %s57, %s58
    %p60 = scmp.eq.s32.totalorder %s59, 0
    %s62 = sadd.s32 %s61, 1
    %s63 = scalar_select %p60, %s61, %s62
    %p66 = pneg %p60
    %p67 = scmp.eq.s32.totalorder %s9, 7
    %p68 = por %p66, %p67
    %p69 = scmp.ne.s32.totalorder %s61, %s64
    %p70 = scmp.eq.s32.totalorder %s9, 0
    %p71 = por %p69, %p70
    %p72 = scmp.ne.s32.totalorder %s61, %s64
    %p73 = scmp.eq.s32.totalorder %s14, 7
    %p74 = por %p72, %p73
    %p75 = scmp.ne.s32.totalorder %s64, %s65
    %p76 = scmp.eq.s32.totalorder %s14, 0
    %p77 = por %p75, %p76
    %p78 = scmp.ne.s32.totalorder %s64, %s65
    %p79 = scmp.eq.s32.totalorder %s15, 7
    %p80 = por %p78, %p79
    %p82 = scmp.ne.s32.totalorder %s65, %s81
    %p83 = scmp.eq.s32.totalorder %s15, 0
    %p84 = por %p82, %p83
    %s85 = ssub.s32 %s16, %s28
    %s86 = ssub.s32 %s17, %s24
    %s87 = sor.u32 %s85, %s86
    %p88 = scmp.eq.s32.totalorder %s87, 0
    %s90 = sadd.s32 %s89, 1
    %s91 = scalar_select %p88, %s89, %s90
    %p94 = pneg %p88
    %p95 = scmp.eq.s32.totalorder %s9, 7
    %p96 = por %p94, %p95
    %p97 = scmp.ne.s32.totalorder %s89, %s92
    %p98 = scmp.eq.s32.totalorder %s9, 0
    %p99 = por %p97, %p98
    %p100 = scmp.ne.s32.totalorder %s89, %s92
    %p101 = scmp.eq.s32.totalorder %s14, 7
    %p102 = por %p100, %p101
    %p103 = scmp.ne.s32.totalorder %s92, %s93
    %p104 = scmp.eq.s32.totalorder %s14, 0
    %p105 = por %p103, %p104
    %p106 = scmp.ne.s32.totalorder %s92, %s93
    %p107 = scmp.eq.s32.totalorder %s15, 7
    %p108 = por %p106, %p107
    %p110 = scmp.ne.s32.totalorder %s93, %s109
    %p111 = scmp.eq.s32.totalorder %s15, 0
    %p112 = por %p110, %p111
    %s113 = ssub.s32 %s16, %s28
    %s114 = ssub.s32 %s17, %s24
    %s115 = sor.u32 %s113, %s114
    %p116 = scmp.eq.s32.totalorder %s115, 0
    %s118 = sadd.s32 %s117, 1
    %s119 = scalar_select %p116, %s117, %s118
    %p122 = pneg %p116
    %p123 = scmp.eq.s32.totalorder %s9, 7
    %p124 = por %p122, %p123
    %p125 = scmp.ne.s32.totalorder %s117, %s120
    %p126 = scmp.eq.s32.totalorder %s9, 0
    %p127 = por %p125, %p126
    %p128 = scmp.ne.s32.totalorder %s117, %s120
    %p129 = scmp.eq.s32.totalorder %s14, 7
    %p130 = por %p128, %p129
    %p131 = scmp.ne.s32.totalorder %s120, %s121
    %p132 = scmp.eq.s32.totalorder %s14, 0
    %p133 = por %p131, %p132
    %p134 = scmp.ne.s32.totalorder %s120, %s121
    %p135 = scmp.eq.s32.totalorder %s15, 7
    %p136 = por %p134, %p135
    %p138 = scmp.ne.s32.totalorder %s121, %s137
    %p139 = scmp.eq.s32.totalorder %s15, 0
    %p140 = por %p138, %p139
    %p141 = scmp.le.s32.totalorder 1, %s9
    %p142 = scmp.lt.s32.totalorder %s9, 9
    %p143 = pnand %p141, %p142
    %p144 = pneg %p143
    // Predicated region
    $region9: #{transformer_encoder_forward.17} parent=5 // pred_check
      _
    $region10: #{transformer_encoder_forward.17} parent=5 // pred_check_branch
      %146 = sbr.rel (%p143) target = $region12
    $region11: #{transformer_encoder_forward.17} parent=5 // pred_region
      %s147 = ssub.s32 %s9, 1
    $region12: #{transformer_encoder_forward.17} parent=5 // pred_fallthru
      _
    %p148 = scmp.lt.s32.totalorder %s9, 8
    // Predicated region
    $region13: #{transformer_encoder_forward.17} parent=5 // pred_check
      %p149 = pneg %p148
    $region14: #{transformer_encoder_forward.17} parent=5 // pred_check_branch
      %151 = sbr.rel (%p149) target = $region16
    $region15: #{transformer_encoder_forward.17} parent=5 // pred_region
      // Predicated region
      $region17: #{transformer_encoder_forward.17} parent=15 // pred_check
        %p152 = pneg %p43
      $region18: #{transformer_encoder_forward.17} parent=15 // pred_check_branch
        %154 = sbr.rel (%p152) target = $region20
      $region19: #{transformer_encoder_forward.17} parent=15 // pred_region
        %p155 = scmp.lt.s32.totalorder %s16, 1
        %s156 = scalar_select %p155, %s16, 1
        %p157 = scmp.lt.s32.totalorder %s17, 3
        %s158 = scalar_select %p157, %s17, 3
        %s159 = smul.addr %s156, 4
        %s160 = sadd.s32 %s158, %s159
        %s161 = smul.addr %s160, 8
        %s162 = scalar_lea.vmem %s0, %s161
      $region20: #{transformer_encoder_forward.17} parent=15 // pred_fallthru
        _
      // Predicated region
      $region21: #{transformer_encoder_forward.17} parent=15 // pred_check
        %p163 = pneg %p71
      $region22: #{transformer_encoder_forward.17} parent=15 // pred_check_branch
        %165 = sbr.rel (%p163) target = $region24
      $region23: #{transformer_encoder_forward.17} parent=15 // pred_region
        %p166 = scmp.lt.s32.totalorder %s16, 1
        %s167 = scalar_select %p166, %s16, 1
        %p168 = scmp.lt.s32.totalorder %s17, 3
        %s169 = scalar_select %p168, %s17, 3
        %s170 = smul.addr %s167, 4
        %s171 = sadd.s32 %s169, %s170
        %s172 = smul.addr %s171, 8
        %s173 = scalar_lea.vmem %s1, %s172
      $region24: #{transformer_encoder_forward.17} parent=15 // pred_fallthru
        _
      // Predicated region
      $region25: #{transformer_encoder_forward.17} parent=15 // pred_check
        %p174 = pneg %p99
      $region26: #{transformer_encoder_forward.17} parent=15 // pred_check_branch
        %176 = sbr.rel (%p174) target = $region28
      $region27: #{transformer_encoder_forward.17} parent=15 // pred_region
        %p177 = scmp.lt.s32.totalorder %s16, 1
        %s178 = scalar_select %p177, %s16, 1
        %p179 = scmp.lt.s32.totalorder %s17, 3
        %s180 = scalar_select %p179, %s17, 3
        %s181 = smul.addr %s178, 4
        %s182 = sadd.s32 %s180, %s181
        %s183 = smul.addr %s182, 8
        %s184 = scalar_lea.vmem %s2, %s183
      $region28: #{transformer_encoder_forward.17} parent=15 // pred_fallthru
        _
    $region16: #{transformer_encoder_forward.17} parent=5 // pred_fallthru
      _
    %p185 = scmp.le.s32.totalorder 1, %s9
    %p186 = scmp.lt.s32.totalorder %s9, 9
    %p187 = pnand %p185, %p186
    %p188 = pneg %p187
    // Predicated region
    $region29: #{transformer_encoder_forward.17} parent=5 // pred_check
      _
    $region30: #{transformer_encoder_forward.17} parent=5 // pred_check_branch
      %190 = sbr.rel (%p187) target = $region32
    $region31: #{transformer_encoder_forward.17} parent=5 // pred_region
      %s191 = ssub.s32 %s9, 1
      %p192 = scmp.lt.s32.totalorder %s18, 1
      %s193 = scalar_select %p192, %s18, 1
      %p194 = scmp.lt.s32.totalorder %s19, 3
      %s195 = scalar_select %p194, %s19, 3
      %s196 = smul.addr %s193, 4
      %s197 = sadd.s32 %s195, %s196
      %s198 = smul.addr %s197, 8
      %s199 = scalar_lea.vmem %s0, %s198
      %p200 = pneg %p49
      %p201 = pneg %p46
      %p202 = scmp.lt.s32.totalorder %s18, 1
      %s203 = scalar_select %p202, %s18, 1
      %p204 = scmp.lt.s32.totalorder %s19, 3
      %s205 = scalar_select %p204, %s19, 3
      %s206 = smul.addr %s203, 4
      %s207 = sadd.s32 %s205, %s206
      %s208 = smul.addr %s207, 8
      %s209 = scalar_lea.vmem %s1, %s208
      %p210 = pneg %p77
      %p211 = pneg %p74
      %p212 = scmp.lt.s32.totalorder %s18, 1
      %s213 = scalar_select %p212, %s18, 1
      %p214 = scmp.lt.s32.totalorder %s19, 3
      %s215 = scalar_select %p214, %s19, 3
      %s216 = smul.addr %s213, 4
      %s217 = sadd.s32 %s215, %s216
      %s218 = smul.addr %s217, 8
      %s219 = scalar_lea.vmem %s2, %s218
      %p220 = pneg %p105
      %p221 = pneg %p102
      %p222 = pneg %p133
      %p223 = pneg %p130
      %p224 = scmp.lt.s32.totalorder %s18, 1
      %s225 = scalar_select %p224, %s18, 1
      %p226 = scmp.lt.s32.totalorder %s19, 3
      %s227 = scalar_select %p226, %s19, 3
      %s228 = smul.addr %s225, 4
      %s229 = sadd.s32 %s227, %s228
      %s230 = smul.addr %s229, 8
      %s231 = scalar_lea.vmem %s3, %s230
      %p232 = scmp.lt.s32.totalorder %s18, 1
      %s233 = scalar_select %p232, %s18, 1
      %p234 = scmp.lt.s32.totalorder %s19, 3
      %s235 = scalar_select %p234, %s19, 3
      %s236 = smul.addr %s233, 4
      %s237 = sadd.s32 %s235, %s236
      %s238 = smul.addr %s237, 8
      %s239 = scalar_lea.vmem %s0, %s238
      %p240 = scmp.lt.s32.totalorder %s18, 1
      %s241 = scalar_select %p240, %s18, 1
      %p242 = scmp.lt.s32.totalorder %s19, 3
      %s243 = scalar_select %p242, %s19, 3
      %s244 = smul.addr %s241, 4
      %s245 = sadd.s32 %s243, %s244
      %s246 = smul.addr %s245, 8
      %s247 = scalar_lea.vmem %s1, %s246
      %p248 = scmp.lt.s32.totalorder %s18, 1
      %s249 = scalar_select %p248, %s18, 1
      %p250 = scmp.lt.s32.totalorder %s19, 3
      %s251 = scalar_select %p250, %s19, 3
      %s252 = smul.addr %s249, 4
      %s253 = sadd.s32 %s251, %s252
      %s254 = smul.addr %s253, 8
      %s255 = scalar_lea.vmem %s2, %s254
      %p256 = scmp.lt.s32.totalorder %s18, 1
      %s257 = scalar_select %p256, %s18, 1
      %p258 = scmp.lt.s32.totalorder %s19, 3
      %s259 = scalar_select %p258, %s19, 3
      %s260 = smul.addr %s257, 4
      %s261 = sadd.s32 %s259, %s260
      %s262 = smul.addr %s261, 8
      %s263 = scalar_lea.vmem %s3, %s262
      %v264 = vld [vmem:[%s239] sm:$0xff]
      %v265 = vld [vmem:[%s247] sm:$0xff]
      %v266 = vld [vmem:[%s255] sm:$0xff]
      %vm267 = vcmask 64512
      %v269 = vsel %vm267, %v264, 0
      %v272 = vsel %vm267, %v265, 0
      %274 = vmatprep.subr.mxu0 0.0
      %275 = vmatpush1.xpose.msra.mxu0 0.0
      %276 = vmatprep.subr.mxu0 0.0
      %277 = vmatpush1.xpose.msra.mxu0 0.0
      %278 = vmatprep.subr.mxu0 0.0
      %279 = vmatpush1.xpose.msra.mxu0 0.0
      %280 = vmatprep.subr.mxu0 0.0
      %281 = vmatpush1.xpose.msra.mxu0 0.0
      %282 = vmatprep.subr.mxu0 0.0
      %283 = vmatpush1.xpose.msra.mxu0 0.0
      %284 = vmatprep.subr.mxu0 0.0
      %285 = vmatpush1.xpose.msra.mxu0 0.0
      %286 = vmatprep.subr.mxu0 0.0
      %287 = vmatpush1.xpose.msra.mxu0 0.0
      %288 = vmatprep.subr.mxu0 0.0
      %289 = vmatpush1.xpose.msra.mxu0 0.0
      %290 = vmatprep.subr.mxu0 0.0
      %291 = vmatpush1.xpose.msra.mxu0 0.0
      %292 = vmatprep.subr.mxu0 0.0
      %293 = vmatpush1.xpose.msra.mxu0 0.0
      %294 = vmatprep.subr.mxu0 0.0
      %295 = vmatpush1.xpose.msra.mxu0 0.0
      %296 = vmatprep.subr.mxu0 0.0
      %297 = vmatpush1.xpose.msra.mxu0 0.0
      %298 = vmatprep.subr.mxu0 0.0
      %299 = vmatpush1.xpose.msra.mxu0 0.0
      %300 = vmatprep.subr.mxu0 0.0
      %301 = vmatpush1.xpose.msra.mxu0 0.0
      %302 = vmatprep.subr.mxu0 0.0
      %303 = vmatpush1.xpose.msra.mxu0 0.0
      %304 = vmatprep.subr.mxu0 0.0
      %305 = vmatpush1.xpose.msra.mxu0 %v272
      %306 = vmatprep.subr.mxu0 0.0
      %307 = vmatpush2.xpose.msra.mxu0 0.0
      %308 = vmatprep.subr.mxu0 0.0
      %309 = vmatpush2.xpose.msra.mxu0 0.0
      %310 = vmatprep.subr.mxu0 0.0
      %311 = vmatpush2.xpose.msra.mxu0 0.0
      %312 = vmatprep.subr.mxu0 0.0
      %313 = vmatpush2.xpose.msra.mxu0 0.0
      %314 = vmatprep.subr.mxu0 0.0
      %315 = vmatpush2.xpose.msra.mxu0 0.0
      %316 = vmatprep.subr.mxu0 0.0
      %317 = vmatpush2.xpose.msra.mxu0 0.0
      %318 = vmatprep.subr.mxu0 0.0
      %319 = vmatpush2.xpose.msra.mxu0 0.0
      %320 = vmatprep.subr.mxu0 0.0
      %321 = vmatpush2.xpose.msra.mxu0 0.0
      %322 = vmatprep.subr.mxu0 0.0
      %323 = vmatpush2.xpose.msra.mxu0 0.0
      %324 = vmatprep.subr.mxu0 0.0
      %325 = vmatpush2.xpose.msra.mxu0 0.0
      %326 = vmatprep.subr.mxu0 0.0
      %327 = vmatpush2.xpose.msra.mxu0 0.0
      %328 = vmatprep.subr.mxu0 0.0
      %329 = vmatpush2.xpose.msra.mxu0 0.0
      %330 = vmatprep.subr.mxu0 0.0
      %331 = vmatpush2.xpose.msra.mxu0 0.0
      %332 = vmatprep.subr.mxu0 0.0
      %333 = vmatpush2.xpose.msra.mxu0 0.0
      %334 = vmatprep.subr.mxu0 0.0
      %335 = vmatpush2.xpose.msra.mxu0 0.0
      %336 = vmatprep.subr.mxu0 0.0
      %337 = vmatpush2.xpose.msra.mxu0 0.0
      %338 = vmatprep.mubr.f32.mxu0 0.0
      %339 = vmatmul.mubr.f32.gmra.mxu0 %v269
      %v340 = vpop.f32.mrf.mxu0
      %v341 = vadd.f32 0.0, %v340
      %v342 = vpop.f32.mrf.mxu0
      %343 = vdwg.mxu0
      %v344 = vmul.f32 %v341, 0.35355338
      %v345 = vsel %vm267, %v344, -inf
      %346 = vmax.xlane.f32.xlu0 %v345
      %v347 = vpop.xlane.xlu0 %346
      %v348 = vsub.f32 %v344, %v347
      %v349 = vmul.f32 %v348, 1.442695
      %v350 = vpow.pop %v349
      %v351 = vsel %vm267, %v350, 0.0
      %352 = vadd.xlane.f32.xlu0 %v351
      %v353 = vpop.xlane.xlu0 %352
      %v355 = vsel %vm267, %v350, 0
      %357 = vmatprep.subr.mxu0 0.0
      %358 = vmatpush1.msra.mxu0 0.0
      %359 = vmatprep.subr.mxu0 0.0
      %360 = vmatpush1.msra.mxu0 0.0
      %361 = vmatprep.subr.mxu0 0.0
      %362 = vmatpush1.msra.mxu0 0.0
      %363 = vmatprep.subr.mxu0 0.0
      %364 = vmatpush1.msra.mxu0 0.0
      %365 = vmatprep.subr.mxu0 0.0
      %366 = vmatpush1.msra.mxu0 0.0
      %367 = vmatprep.subr.mxu0 0.0
      %368 = vmatpush1.msra.mxu0 0.0
      %369 = vmatprep.subr.mxu0 0.0
      %370 = vmatpush1.msra.mxu0 0.0
      %371 = vmatprep.subr.mxu0 0.0
      %372 = vmatpush1.msra.mxu0 0.0
      %373 = vmatprep.subr.mxu0 0.0
      %374 = vmatpush1.msra.mxu0 0.0
      %375 = vmatprep.subr.mxu0 0.0
      %376 = vmatpush1.msra.mxu0 0.0
      %377 = vmatprep.subr.mxu0 0.0
      %378 = vmatpush1.msra.mxu0 0.0
      %379 = vmatprep.subr.mxu0 0.0
      %380 = vmatpush1.msra.mxu0 0.0
      %381 = vmatprep.subr.mxu0 0.0
      %382 = vmatpush1.msra.mxu0 0.0
      %383 = vmatprep.subr.mxu0 0.0
      %384 = vmatpush1.msra.mxu0 0.0
      %385 = vmatprep.subr.mxu0 0.0
      %386 = vmatpush1.msra.mxu0 0.0
      %387 = vmatprep.subr.mxu0 0.0
      %388 = vmatpush1.msra.mxu0 %v266
      %389 = vmatprep.subr.mxu0 0.0
      %390 = vmatpush2.msra.mxu0 0.0
      %391 = vmatprep.subr.mxu0 0.0
      %392 = vmatpush2.msra.mxu0 0.0
      %393 = vmatprep.subr.mxu0 0.0
      %394 = vmatpush2.msra.mxu0 0.0
      %395 = vmatprep.subr.mxu0 0.0
      %396 = vmatpush2.msra.mxu0 0.0
      %397 = vmatprep.subr.mxu0 0.0
      %398 = vmatpush2.msra.mxu0 0.0
      %399 = vmatprep.subr.mxu0 0.0
      %400 = vmatpush2.msra.mxu0 0.0
      %401 = vmatprep.subr.mxu0 0.0
      %402 = vmatpush2.msra.mxu0 0.0
      %403 = vmatprep.subr.mxu0 0.0
      %404 = vmatpush2.msra.mxu0 0.0
      %405 = vmatprep.subr.mxu0 0.0
      %406 = vmatpush2.msra.mxu0 0.0
      %407 = vmatprep.subr.mxu0 0.0
      %408 = vmatpush2.msra.mxu0 0.0
      %409 = vmatprep.subr.mxu0 0.0
      %410 = vmatpush2.msra.mxu0 0.0
      %411 = vmatprep.subr.mxu0 0.0
      %412 = vmatpush2.msra.mxu0 0.0
      %413 = vmatprep.subr.mxu0 0.0
      %414 = vmatpush2.msra.mxu0 0.0
      %415 = vmatprep.subr.mxu0 0.0
      %416 = vmatpush2.msra.mxu0 0.0
      %417 = vmatprep.subr.mxu0 0.0
      %418 = vmatpush2.msra.mxu0 0.0
      %419 = vmatprep.subr.mxu0 0.0
      %420 = vmatpush2.msra.mxu0 0.0
      %421 = vmatprep.mubr.f32.mxu0 0.0
      %422 = vmatmul.mubr.f32.gmra.mxu0 %v355
      %v423 = vpop.f32.mrf.mxu0
      %v424 = vadd.f32 0.0, %v423
      %v425 = vpop.f32.mrf.mxu0
      %426 = vdwg.mxu0
      %v427 = vrcp.pop %v353
      %v428 = vmul.f32 %v424, %v427
      %429 = vst.msk [vmem:[%s263] sm:$0xff] %vm267, %v428
      %p430 = scmp.lt.s32.totalorder %s18, 1
      %s431 = scalar_select %p430, %s18, 1
      %p432 = scmp.lt.s32.totalorder %s19, 3
      %s433 = scalar_select %p432, %s19, 3
      %s434 = smul.addr %s431, 4
      %s435 = sadd.s32 %s433, %s434
      %s436 = smul.addr %s435, 8
      %s437 = scalar_lea.vmem %s3, %s436
      // Predicated region
      $region33: #{transformer_encoder_forward.17} parent=31 // pred_check
        %p438 = pneg %p130
      $region34: #{transformer_encoder_forward.17} parent=31 // pred_check_branch
        %440 = sbr.rel (%p438) target = $region36
      $region35: #{transformer_encoder_forward.17} parent=31 // pred_region
        _
      $region36: #{transformer_encoder_forward.17} parent=31 // pred_fallthru
        _
    $region32: #{transformer_encoder_forward.17} parent=5 // pred_fallthru
      _
    %p441 = scmp.le.s32.totalorder 2, %s9
    // Predicated region
    $region37: #{transformer_encoder_forward.17} parent=5 // pred_check
      %p442 = pneg %p441
    $region38: #{transformer_encoder_forward.17} parent=5 // pred_check_branch
      %444 = sbr.rel (%p442) target = $region40
    $region39: #{transformer_encoder_forward.17} parent=5 // pred_region
      %s445 = ssub.s32 %s9, 2
      // Predicated region
      $region41: #{transformer_encoder_forward.17} parent=39 // pred_check
        %p446 = pneg %p136
      $region42: #{transformer_encoder_forward.17} parent=39 // pred_check_branch
        %448 = sbr.rel (%p446) target = $region44
      $region43: #{transformer_encoder_forward.17} parent=39 // pred_region
        %p449 = scmp.lt.s32.totalorder %s20, 1
        %s450 = scalar_select %p449, %s20, 1
        %p451 = scmp.lt.s32.totalorder %s21, 3
        %s452 = scalar_select %p451, %s21, 3
        %s453 = smul.addr %s450, 4
        %s454 = sadd.s32 %s452, %s453
        %s455 = smul.addr %s454, 8
        %s456 = scalar_lea.vmem %s3, %s455
      $region44: #{transformer_encoder_forward.17} parent=39 // pred_fallthru
        _
    $region40: #{transformer_encoder_forward.17} parent=5 // pred_fallthru
      _
  $region6: #{transformer_encoder_forward.17} parent=0 // loop_footer
    %s13 = sadd.s32 1, %s9
  $region7: #{transformer_encoder_forward.17} parent=0 // loop_footer_branch
    %8 = sbr.rel target = $region3
  $region8: #{transformer_encoder_forward.17} parent=0 // loop_exit
    _

// kernel: transformer_encoder_forward.19
$region0: #{transformer_encoder_forward.19}
  #allocation0 [shape = 'u32[]', space=smem, size = 0x4, offset = 0x4, fixed_abs, tag = 'smem constant byte address 0x4 - core index']
  #allocation1 [shape = 'u32[144,128]{1,0:T(1,128)}', space=vmem, size = 0x12000, scoped, tag = 'internal scratch']
  %s0 = inlined_call_operand.vmem [shape: f32[16,32], index: 0, kind: input, shape index: {}]
  %s1 = inlined_call_operand.vmem [shape: f32[16,32], index: 1, kind: input, shape index: {}]
  %s2 = inlined_call_operand.vmem [shape: f32[1,32], index: 2, kind: input, shape index: {}]
  %s3 = inlined_call_operand.vmem [shape: f32[1,32], index: 3, kind: input, shape index: {}]
  %s4 = inlined_call_operand.vmem [shape: f32[16,32], index: 4, kind: output, shape index: {}]
  %s5 = sld [smem:[#allocation0]]
  $region26: #{transformer_encoder_forward.19} parent=0
    _
  %s7 = ssub.s32 1, %s5
  %s8 = scalar_select 0, %s7, %s5
  // Predicated region
  $region2: #{transformer_encoder_forward.19} parent=0 // pred_check
    _
  $region3: #{transformer_encoder_forward.19} parent=0 // pred_check_branch
    %10 = sbr.rel (0) target = $region5
  $region4: #{transformer_encoder_forward.19} parent=0 // pred_region
    _
  $region5: #{transformer_encoder_forward.19} parent=0 // pred_fallthru
    _
  // Predicated region
  $region6: #{transformer_encoder_forward.19} parent=0 // pred_check
    _
  $region7: #{transformer_encoder_forward.19} parent=0 // pred_check_branch
    %12 = sbr.rel (0) target = $region9
  $region8: #{transformer_encoder_forward.19} parent=0 // pred_region
    _
  $region9: #{transformer_encoder_forward.19} parent=0 // pred_fallthru
    _
  // Predicated region
  $region10: #{transformer_encoder_forward.19} parent=0 // pred_check
    _
  $region11: #{transformer_encoder_forward.19} parent=0 // pred_check_branch
    %14 = sbr.rel (0) target = $region13
  $region12: #{transformer_encoder_forward.19} parent=0 // pred_region
    _
  $region13: #{transformer_encoder_forward.19} parent=0 // pred_fallthru
    _
  // Predicated region
  $region14: #{transformer_encoder_forward.19} parent=0 // pred_check
    _
  $region15: #{transformer_encoder_forward.19} parent=0 // pred_check_branch
    %16 = sbr.rel (0) target = $region17
  $region16: #{transformer_encoder_forward.19} parent=0 // pred_region
    _
  $region17: #{transformer_encoder_forward.19} parent=0 // pred_fallthru
    _
  %v17 = vld [vmem:[%s0] sm:$0xff]
  %v18 = vld [vmem:[%s0 + $0x8] sm:$0xff]
  %v19 = vld [vmem:[%s1] sm:$0xff]
  %v20 = vld [vmem:[%s1 + $0x8] sm:$0xff]
  %v21 = vadd.f32 %v17, %v19
  %v22 = vadd.f32 %v18, %v20
  %vm23 = vcmask 261120
  %v24 = vsel %vm23, %v21, 0.0
  %25 = vadd.xlane.f32.xlu0 %v24
  %v26 = vpop.xlane.xlu0 %25
  %v27 = vsel %vm23, %v22, 0.0
  %28 = vadd.xlane.f32.xlu0 %v27
  %v29 = vpop.xlane.xlu0 %28
  %v30 = vrcp.pop 32.0
  %v31 = vmul.f32 %v26, %v30
  %v32 = vmul.f32 %v29, %v30
  %v33 = vsub.f32 %v21, %v31
  %v34 = vsub.f32 %v22, %v32
  %v35 = vmul.f32 %v33, %v33
  %v36 = vmul.f32 %v34, %v34
  %v37 = vsel %vm23, %v35, 0.0
  %38 = vadd.xlane.f32.xlu0 %v37
  %v39 = vpop.xlane.xlu0 %38
  %v40 = vsel %vm23, %v36, 0.0
  %41 = vadd.xlane.f32.xlu0 %v40
  %v42 = vpop.xlane.xlu0 %41
  %v43 = vmul.f32 %v39, %v30
  %v44 = vmul.f32 %v42, %v30
  %v45 = vadd.f32 %v43, 1e-05
  %v46 = vadd.f32 %v44, 1e-05
  %v47 = vrsqrt.pop %v45
  %v48 = vrsqrt.pop %v46
  %v49 = vmul.f32 %v33, %v47
  %v50 = vmul.f32 %v34, %v48
  %v51 = vld [vmem:[%s2] sm:$0x1]
  %v53 = vlaneseq
  %v54 = vshrl.u32 %v53, 7
  %v55 = vsub.s32 0, %v54
  %v56 = vrot.slane %v51, %v55
  %v58 = vmul.f32 %v49, %v56
  %v59 = vmul.f32 %v50, %v56
  %v60 = vld [vmem:[%s3] sm:$0x1]
  %v62 = vlaneseq
  %v63 = vshrl.u32 %v62, 7
  %v64 = vsub.s32 0, %v63
  %v65 = vrot.slane %v60, %v64
  %v67 = vadd.f32 %v58, %v65
  %v68 = vadd.f32 %v59, %v65
  %69 = vst.msk [vmem:[%s4] sm:$0xff] %vm23, %v67
  %70 = vst.msk [vmem:[%s4 + $0x8] sm:$0xff] %vm23, %v68
  // Predicated region
  $region18: #{transformer_encoder_forward.19} parent=0 // pred_check
    _
  $region19: #{transformer_encoder_forward.19} parent=0 // pred_check_branch
    %72 = sbr.rel (0) target = $region21
  $region20: #{transformer_encoder_forward.19} parent=0 // pred_region
    _
  $region21: #{transformer_encoder_forward.19} parent=0 // pred_fallthru
    _
  // Predicated region
  $region22: #{transformer_encoder_forward.19} parent=0 // pred_check
    _
  $region23: #{transformer_encoder_forward.19} parent=0 // pred_check_branch
    %74 = sbr.rel (0) target = $region25
  $region24: #{transformer_encoder_forward.19} parent=0 // pred_region
    _
  $region25: #{transformer_encoder_forward.19} parent=0 // pred_fallthru
    _

// kernel: transformer_encoder_forward.20
$region0: #{transformer_encoder_forward.20}
  #allocation0 [shape = 'u32[]', space=smem, size = 0x4, offset = 0x4, fixed_abs, tag = 'smem constant byte address 0x4 - core index']
  #allocation1 [shape = 'u32[144,128]{1,0:T(1,128)}', space=vmem, size = 0x12000, scoped, tag = 'internal scratch']
  #allocation2 [shape = 'f32[16,32]{1,0:T(8,128)}', space=vmem, size = 0x2000, scoped, tag = 'scratch operand']
  %s0 = inlined_call_operand.vmem [shape: f32[16,32], index: 0, kind: input, shape index: {}]
  %s1 = inlined_call_operand.vmem [shape: f32[32,32], index: 1, kind: input, shape index: {}]
  %s2 = inlined_call_operand.vmem [shape: f32[1,32], index: 2, kind: input, shape index: {}]
  %s3 = inlined_call_operand.vmem [shape: f32[16,32], index: 3, kind: output, shape index: {}]
  %s4 = sld [smem:[#allocation0]]
  $region30: #{transformer_encoder_forward.20} parent=0
    _
  %s6 = ssub.s32 1, %s4
  %s7 = scalar_select 0, %s6, %s4
  // Predicated region
  $region2: #{transformer_encoder_forward.20} parent=0 // pred_check
    _
  $region3: #{transformer_encoder_forward.20} parent=0 // pred_check_branch
    %9 = sbr.rel (0) target = $region5
  $region4: #{transformer_encoder_forward.20} parent=0 // pred_region
    _
  $region5: #{transformer_encoder_forward.20} parent=0 // pred_fallthru
    _
  // Predicated region
  $region6: #{transformer_encoder_forward.20} parent=0 // pred_check
    _
  $region7: #{transformer_encoder_forward.20} parent=0 // pred_check_branch
    %11 = sbr.rel (0) target = $region9
  $region8: #{transformer_encoder_forward.20} parent=0 // pred_region
    _
  $region9: #{transformer_encoder_forward.20} parent=0 // pred_fallthru
    _
  // Predicated region
  $region10: #{transformer_encoder_forward.20} parent=0 // pred_check
    _
  $region11: #{transformer_encoder_forward.20} parent=0 // pred_check_branch
    %13 = sbr.rel (0) target = $region13
  $region12: #{transformer_encoder_forward.20} parent=0 // pred_region
    _
  $region13: #{transformer_encoder_forward.20} parent=0 // pred_fallthru
    _
  %p14 = scmp.eq.s32.totalorder 0, 0
  // Predicated region
  $region14: #{transformer_encoder_forward.20} parent=0 // pred_check
    %p15 = pneg %p14
  $region15: #{transformer_encoder_forward.20} parent=0 // pred_check_branch
    %17 = sbr.rel (%p15) target = $region17
  $region16: #{transformer_encoder_forward.20} parent=0 // pred_region
    %vm18 = vcmask 261120
    %19 = vst.msk [vmem:[#allocation2] sm:$0xff] %vm18, 0.0
    %20 = vst.msk [vmem:[#allocation2 + $0x8] sm:$0xff] %vm18, 0.0
  $region17: #{transformer_encoder_forward.20} parent=0 // pred_fallthru
    _
  %v21 = vld [vmem:[#allocation2] sm:$0xff]
  %v22 = vld [vmem:[#allocation2 + $0x8] sm:$0xff]
  %v23 = vld [vmem:[%s0] sm:$0xff]
  %v24 = vld [vmem:[%s0 + $0x8] sm:$0xff]
  %v25 = vld [vmem:[%s1] sm:$0xff]
  %v26 = vld [vmem:[%s1 + $0x8] sm:$0xff]
  %v27 = vld [vmem:[%s1 + $0x10] sm:$0xff]
  %v28 = vld [vmem:[%s1 + $0x18] sm:$0xff]
  %vm29 = vcmask 261120
  %v31 = vsel %vm29, %v23, 0
  %v34 = vsel %vm29, %v24, 0
  %36 = vmatprep.subr.mxu0 0.0
  %37 = vmatpush1.msra.mxu0 0.0
  %38 = vmatprep.subr.mxu0 0.0
  %39 = vmatpush1.msra.mxu0 0.0
  %40 = vmatprep.subr.mxu0 0.0
  %41 = vmatpush1.msra.mxu0 0.0
  %42 = vmatprep.subr.mxu0 0.0
  %43 = vmatpush1.msra.mxu0 0.0
  %44 = vmatprep.subr.mxu0 0.0
  %45 = vmatpush1.msra.mxu0 0.0
  %46 = vmatprep.subr.mxu0 0.0
  %47 = vmatpush1.msra.mxu0 0.0
  %48 = vmatprep.subr.mxu0 0.0
  %49 = vmatpush1.msra.mxu0 0.0
  %50 = vmatprep.subr.mxu0 0.0
  %51 = vmatpush1.msra.mxu0 0.0
  %52 = vmatprep.subr.mxu0 0.0
  %53 = vmatpush1.msra.mxu0 0.0
  %54 = vmatprep.subr.mxu0 0.0
  %55 = vmatpush1.msra.mxu0 0.0
  %56 = vmatprep.subr.mxu0 0.0
  %57 = vmatpush1.msra.mxu0 0.0
  %58 = vmatprep.subr.mxu0 0.0
  %59 = vmatpush1.msra.mxu0 0.0
  %60 = vmatprep.subr.mxu0 0.0
  %61 = vmatpush1.msra.mxu0 %v28
  %62 = vmatprep.subr.mxu0 0.0
  %63 = vmatpush1.msra.mxu0 %v27
  %64 = vmatprep.subr.mxu0 0.0
  %65 = vmatpush1.msra.mxu0 %v26
  %66 = vmatprep.subr.mxu0 0.0
  %67 = vmatpush1.msra.mxu0 %v25
  %68 = vmatprep.subr.mxu0 0.0
  %69 = vmatpush2.msra.mxu0 0.0
  %70 = vmatprep.subr.mxu0 0.0
  %71 = vmatpush2.msra.mxu0 0.0
  %72 = vmatprep.subr.mxu0 0.0
  %73 = vmatpush2.msra.mxu0 0.0
  %74 = vmatprep.subr.mxu0 0.0
  %75 = vmatpush2.msra.mxu0 0.0
  %76 = vmatprep.subr.mxu0 0.0
  %77 = vmatpush2.msra.mxu0 0.0
  %78 = vmatprep.subr.mxu0 0.0
  %79 = vmatpush2.msra.mxu0 0.0
  %80 = vmatprep.subr.mxu0 0.0
  %81 = vmatpush2.msra.mxu0 0.0
  %82 = vmatprep.subr.mxu0 0.0
  %83 = vmatpush2.msra.mxu0 0.0
  %84 = vmatprep.subr.mxu0 0.0
  %85 = vmatpush2.msra.mxu0 0.0
  %86 = vmatprep.subr.mxu0 0.0
  %87 = vmatpush2.msra.mxu0 0.0
  %88 = vmatprep.subr.mxu0 0.0
  %89 = vmatpush2.msra.mxu0 0.0
  %90 = vmatprep.subr.mxu0 0.0
  %91 = vmatpush2.msra.mxu0 0.0
  %92 = vmatprep.subr.mxu0 0.0
  %93 = vmatpush2.msra.mxu0 0.0
  %94 = vmatprep.subr.mxu0 0.0
  %95 = vmatpush2.msra.mxu0 0.0
  %96 = vmatprep.subr.mxu0 0.0
  %97 = vmatpush2.msra.mxu0 0.0
  %98 = vmatprep.subr.mxu0 0.0
  %99 = vmatpush2.msra.mxu0 0.0
  %100 = vmatprep.mubr.f32.mxu0 0.0
  %101 = vmatmul.mubr.f32.gmra.mxu0 %v31
  %v102 = vpop.f32.mrf.mxu0
  %v103 = vadd.f32 0.0, %v102
  %v104 = vpop.f32.mrf.mxu0
  %105 = vmatprep.mubr.f32.mxu0 0.0
  %106 = vmatmul.mubr.f32.gmra.mxu0 %v34
  %v107 = vpop.f32.mrf.mxu0
  %v108 = vadd.f32 0.0, %v107
  %v109 = vpop.f32.mrf.mxu0
  %110 = vdwg.mxu0
  %v111 = vadd.f32 %v21, %v103
  %v112 = vadd.f32 %v22, %v108
  %113 = vst.msk [vmem:[#allocation2] sm:$0xff] %vm29, %v111
  %114 = vst.msk [vmem:[#allocation2 + $0x8] sm:$0xff] %vm29, %v112
  // Predicated region
  $region18: #{transformer_encoder_forward.20} parent=0 // pred_check
    %p115 = pneg %p14
  $region19: #{transformer_encoder_forward.20} parent=0 // pred_check_branch
    %117 = sbr.rel (%p115) target = $region21
  $region20: #{transformer_encoder_forward.20} parent=0 // pred_region
    %v118 = vld [vmem:[#allocation2] sm:$0xff]
    %v119 = vld [vmem:[#allocation2 + $0x8] sm:$0xff]
    %v120 = vld [vmem:[%s2] sm:$0x1]
    %v122 = vlaneseq
    %v123 = vshrl.u32 %v122, 7
    %v124 = vsub.s32 0, %v123
    %v125 = vrot.slane %v120, %v124
    %v127 = vadd.f32 %v118, %v125
    %v128 = vadd.f32 %v119, %v125
    %v129 = vmul.f32 %v127, 0.5
    %v130 = vmul.f32 %v128, 0.5
    %v131 = vmul.f32 %v127, 0.044715
    %v132 = vmul.f32 %v128, 0.044715
    %v133 = vmul.f32 %v131, %v127
    %v134 = vmul.f32 %v132, %v128
    %v135 = vmul.f32 %v133, %v127
    %v136 = vmul.f32 %v134, %v128
    %v137 = vadd.f32 %v127, %v135
    %v138 = vadd.f32 %v128, %v136
    %v139 = vmul.f32 %v137, 0.7978846
    %v140 = vmul.f32 %v138, 0.7978846
    %v141 = vtanh.pop %v139
    %v142 = vtanh.pop %v140
    %v143 = vadd.f32 %v141, 1.0
    %v144 = vadd.f32 %v142, 1.0
    %v145 = vmul.f32 %v129, %v143
    %v146 = vmul.f32 %v130, %v144
    %147 = vst.msk [vmem:[%s3] sm:$0xff] %vm29, %v145
    %148 = vst.msk [vmem:[%s3 + $0x8] sm:$0xff] %vm29, %v146
  $region21: #{transformer_encoder_forward.20} parent=0 // pred_fallthru
    _
  // Predicated region
  $region22: #{transformer_encoder_forward.20} parent=0 // pred_check
    _
  $region23: #{transformer_encoder_forward.20} parent=0 // pred_check_branch
    %150 = sbr.rel (0) target = $region25
  $region24: #{transformer_encoder_forward.20} parent=0 // pred_region
    _
  $region25: #{transformer_encoder_forward.20} parent=0 // pred_fallthru
    _
  // Predicated region
  $region26: #{transformer_encoder_forward.20} parent=0 // pred_check
    _
  $region27: #{transformer_encoder_forward.20} parent=0 // pred_check_branch
    %152 = sbr.rel (0) target = $region29
  $region28: #{transformer_encoder_forward.20} parent=0 // pred_region
    _
  $region29: #{transformer_encoder_forward.20} parent=0 // pred_fallthru
    _

// kernel: transformer_encoder_forward.29
$region0: #{transformer_encoder_forward.29}
  #allocation0 [shape = 'u32[]', space=smem, size = 0x4, offset = 0x4, fixed_abs, tag = 'smem constant byte address 0x4 - core index']
  #allocation1 [shape = 'u32[144,128]{1,0:T(1,128)}', space=vmem, size = 0x12000, scoped, tag = 'internal scratch']
  %s0 = inlined_call_operand.vmem [shape: f32[16,32], index: 0, kind: input, shape index: {}]
  %s1 = inlined_call_operand.vmem [shape: f32[16,32], index: 1, kind: input, shape index: {}]
  %s2 = inlined_call_operand.vmem [shape: f32[1,32], index: 2, kind: input, shape index: {}]
  %s3 = inlined_call_operand.vmem [shape: f32[1,32], index: 3, kind: input, shape index: {}]
  %s4 = inlined_call_operand.hbm [shape: f32[16,32], index: 4, kind: output, shape index: {}]
  %s5 = sld [smem:[#allocation0]]
  $region26: #{transformer_encoder_forward.29} parent=0
    _
  %s7 = ssub.s32 1, %s5
  %s8 = scalar_select 0, %s7, %s5
  $region1: #{transformer_encoder_forward.29} parent=0
    #allocation2 [shape = 'u8[8192]{0}', space=vmem, size = 0x2000, scoped, tag = 'output window, operand 0, single buffered']
    #allocation3 [shape = 's32[1]{0}', space=sflag, size = 0x4, scoped, tag = 'scoped memory for transformer_encoder_forward.29']
    %9 = vsyncpa [#allocation3], 0
    // Predicated region
    $region2: #{transformer_encoder_forward.29} parent=1 // pred_check
      _
    $region3: #{transformer_encoder_forward.29} parent=1 // pred_check_branch
      %11 = sbr.rel (0) target = $region5
    $region4: #{transformer_encoder_forward.29} parent=1 // pred_region
      _
    $region5: #{transformer_encoder_forward.29} parent=1 // pred_fallthru
      _
    // Predicated region
    $region6: #{transformer_encoder_forward.29} parent=1 // pred_check
      _
    $region7: #{transformer_encoder_forward.29} parent=1 // pred_check_branch
      %13 = sbr.rel (0) target = $region9
    $region8: #{transformer_encoder_forward.29} parent=1 // pred_region
      _
    $region9: #{transformer_encoder_forward.29} parent=1 // pred_fallthru
      _
    // Predicated region
    $region10: #{transformer_encoder_forward.29} parent=1 // pred_check
      _
    $region11: #{transformer_encoder_forward.29} parent=1 // pred_check_branch
      %15 = sbr.rel (0) target = $region13
    $region12: #{transformer_encoder_forward.29} parent=1 // pred_region
      _
    $region13: #{transformer_encoder_forward.29} parent=1 // pred_fallthru
      _
    // Predicated region
    $region14: #{transformer_encoder_forward.29} parent=1 // pred_check
      _
    $region15: #{transformer_encoder_forward.29} parent=1 // pred_check_branch
      %17 = sbr.rel (0) target = $region17
    $region16: #{transformer_encoder_forward.29} parent=1 // pred_region
      _
    $region17: #{transformer_encoder_forward.29} parent=1 // pred_fallthru
      _
    %v18 = vld [vmem:[%s0] sm:$0xff]
    %v19 = vld [vmem:[%s0 + $0x8] sm:$0xff]
    %v20 = vld [vmem:[%s1] sm:$0xff]
    %v21 = vld [vmem:[%s1 + $0x8] sm:$0xff]
    %v22 = vadd.f32 %v18, %v20
    %v23 = vadd.f32 %v19, %v21
    %vm24 = vcmask 261120
    %v25 = vsel %vm24, %v22, 0.0
    %26 = vadd.xlane.f32.xlu0 %v25
    %v27 = vpop.xlane.xlu0 %26
    %v28 = vsel %vm24, %v23, 0.0
    %29 = vadd.xlane.f32.xlu0 %v28
    %v30 = vpop.xlane.xlu0 %29
    %v31 = vrcp.pop 32.0
    %v32 = vmul.f32 %v27, %v31
    %v33 = vmul.f32 %v30, %v31
    %v34 = vsub.f32 %v22, %v32
    %v35 = vsub.f32 %v23, %v33
    %v36 = vmul.f32 %v34, %v34
    %v37 = vmul.f32 %v35, %v35
    %v38 = vsel %vm24, %v36, 0.0
    %39 = vadd.xlane.f32.xlu0 %v38
    %v40 = vpop.xlane.xlu0 %39
    %v41 = vsel %vm24, %v37, 0.0
    %42 = vadd.xlane.f32.xlu0 %v41
    %v43 = vpop.xlane.xlu0 %42
    %v44 = vmul.f32 %v40, %v31
    %v45 = vmul.f32 %v43, %v31
    %v46 = vadd.f32 %v44, 1e-05
    %v47 = vadd.f32 %v45, 1e-05
    %v48 = vrsqrt.pop %v46
    %v49 = vrsqrt.pop %v47
    %v50 = vmul.f32 %v34, %v48
    %v51 = vmul.f32 %v35, %v49
    %v52 = vld [vmem:[%s2] sm:$0x1]
    %v54 = vlaneseq
    %v55 = vshrl.u32 %v54, 7
    %v56 = vsub.s32 0, %v55
    %v57 = vrot.slane %v52, %v56
    %v59 = vmul.f32 %v50, %v57
    %v60 = vmul.f32 %v51, %v57
    %v61 = vld [vmem:[%s3] sm:$0x1]
    %v63 = vlaneseq
    %v64 = vshrl.u32 %v63, 7
    %v65 = vsub.s32 0, %v64
    %v66 = vrot.slane %v61, %v65
    %v68 = vadd.f32 %v59, %v66
    %v69 = vadd.f32 %v60, %v66
    %70 = vst.msk [vmem:[#allocation2] sm:$0xff] %vm24, %v68
    %71 = vst.msk [vmem:[#allocation2 + $0x8] sm:$0xff] %vm24, %v69
    // Predicated region
    $region18: #{transformer_encoder_forward.29} parent=1 // pred_check
      _
    $region19: #{transformer_encoder_forward.29} parent=1 // pred_check_branch
      %73 = sbr.rel (0) target = $region21
    $region20: #{transformer_encoder_forward.29} parent=1 // pred_region
      %s75 = ssub.s32 256, 256
      %76 = vsyncadd [#allocation3], %s75
      %s77 = sshll.u32 [#allocation2], 4
      %s78 = int_to_ptr.vmem [resolvable:$true] %s77
      %83 = dma.vmem_to_hbm [thread:$0]  %s78, 256, %s4, [#allocation3], 128, 128, 8
    $region21: #{transformer_encoder_forward.29} parent=1 // pred_fallthru
      _
    // Predicated region
    $region22: #{transformer_encoder_forward.29} parent=1 // pred_check
      _
    $region23: #{transformer_encoder_forward.29} parent=1 // pred_check_branch
      %85 = sbr.rel (0) target = $region25
    $region24: #{transformer_encoder_forward.29} parent=1 // pred_region
      %86 = dma.done [#allocation3], 256
    $region25: #{transformer_encoder_forward.29} parent=1 // pred_fallthru
      _
    %87 = vsyncpa [#allocation3], 1

</llo_original>
